<compile_context>
chip_gen: v6e
topology: v6e:2x2x1
jax: 0.10.0
libtpu: 0.0.40
codegen_flags: <defaults>
</compile_context>

<pallas_src>
import math
from functools import partial

import jax
import jax.numpy as jnp
from jax.experimental import pallas as pl
from jax.experimental.pallas import tpu as pltpu

LN_EPS = 1e-5  # nn.LayerNorm default eps


def _layernorm(x, g, b):
    mu = jnp.mean(x, axis=-1, keepdims=True)
    var = jnp.mean((x - mu) ** 2, axis=-1, keepdims=True)
    return (x - mu) * jax.lax.rsqrt(var + LN_EPS) * g + b


def _vmem_limit_bytes():
    """~75% of physical VMEM per core (v7x: ~48 MiB, v5e/v6e: ~96 MiB)."""
    try:
        info = pltpu.get_tpu_info()
        cap = getattr(info, "vmem_capacity_bytes", None)
        if cap:
            return int(cap) * 3 // 4
    except Exception:
        pass
    return 48 * 1024 * 1024


# ----------------------------------------------------------------------------
# Kernel 1: residual + depthwise Conv3d(3x3x3, pad=1, groups=dim)
#   - identity residual folded into the center tap on the host (tap 13 += 1)
#   - three W-pre-shifted, T/H zero-halo slabs built once per batch; the 27 tap
#     reads are then aligned leading-dim slices (no sublane relayouts)
# ----------------------------------------------------------------------------
def _dwconv_residual_kernel(x_ref, w_ref, b_ref, o_ref, xp_ref):
    # x_ref : (1, T, H, W, C) unpadded input block
    # w_ref : (27, C) depthwise taps (tap index = kt*9 + kh*3 + kw), center += 1
    # b_ref : (1, C)
    # o_ref : (1, T, H, W, C) = x + depthwise_conv3d(x) + bias
    # xp_ref: (3, T+2, H+2, W, C) f32 scratch: W-shifted, T/H zero-padded slabs
    _, T, H, W, C = o_ref.shape
    xf = x_ref[0].astype(jnp.float32)                           # (T, H, W, C)

    # zero only the T/H halo shells of each slab (no full-volume clear)
    for kw in range(3):
        xp_ref[kw, 0] = jnp.zeros((H + 2, W, C), jnp.float32)
        xp_ref[kw, T + 1] = jnp.zeros((H + 2, W, C), jnp.float32)
        xp_ref[kw, pl.ds(1, T), 0] = jnp.zeros((T, W, C), jnp.float32)
        xp_ref[kw, pl.ds(1, T), H + 1] = jnp.zeros((T, W, C), jnp.float32)

    # interiors: three W-shifted copies of x (the sublane shift is done ONCE per
    # batch here instead of 18 misaligned reads in the tap loop below)
    zeros_w1 = jnp.zeros((T, H, 1, C), jnp.float32)
    xp_ref[1, pl.ds(1, T), pl.ds(1, H)] = xf                               # kw=1: x[w]
    xp_ref[0, pl.ds(1, T), pl.ds(1, H), pl.ds(0, 1)] = zeros_w1            # kw=0: x[w-1]
    xp_ref[0, pl.ds(1, T), pl.ds(1, H), pl.ds(1, W - 1)] = xf[:, :, : W - 1, :]
    xp_ref[2, pl.ds(1, T), pl.ds(1, H), pl.ds(W - 1, 1)] = zeros_w1        # kw=2: x[w+1]
    xp_ref[2, pl.ds(1, T), pl.ds(1, H), pl.ds(0, W - 1)] = xf[:, :, 1:, :]

    # 27-tap accumulation: all reads are leading-dim (T/H) slices -> aligned
    acc = jnp.zeros((T, H, W, C), jnp.float32)
    for kt in range(3):
        for kh in range(3):
            for kw in range(3):
                tap = w_ref[kt * 9 + kh * 3 + kw, :].astype(jnp.float32)   # (C,)
                acc = acc + xp_ref[kw, pl.ds(kt, T), pl.ds(kh, H)] * tap
    o_ref[0] = (acc + b_ref[0].astype(jnp.float32)).astype(o_ref.dtype)


def dwconv_residual(x_cl, w27, bias):
    B, T, H, W, C = x_cl.shape
    # fold the identity residual into the center tap (kt=kh=kw=1 -> index 13)
    w27 = w27.at[13, :].add(1.0)
    return pl.pallas_call(
        _dwconv_residual_kernel,
        out_shape=jax.ShapeDtypeStruct((B, T, H, W, C), x_cl.dtype),
        grid=(B,),
        in_specs=[
            pl.BlockSpec((1, T, H, W, C), lambda b: (b, 0, 0, 0, 0)),
            pl.BlockSpec((27, C), lambda b: (0, 0)),
            pl.BlockSpec((1, C), lambda b: (0, 0)),
        ],
        out_specs=pl.BlockSpec((1, T, H, W, C), lambda b: (b, 0, 0, 0, 0)),
        scratch_shapes=[pltpu.VMEM((3, T + 2, H + 2, W, C), jnp.float32)],
        compiler_params=pltpu.CompilerParams(
            dimension_semantics=("parallel",),
            vmem_limit_bytes=_vmem_limit_bytes(),
        ),
    )(x_cl, w27, bias)


# ----------------------------------------------------------------------------
# Kernel 2: fused  x + Attention(LN1(x))  followed by  (+ MLP(LN2(.)))
#   grid = (B, N // tq): batch parallel, query-row tiles sequential.
#   At qi == 0 (per batch): LN1(x), K^T (nh, D, N) and V (nh, N, D) are computed
#   once into VMEM scratch and reused by every query tile.
# ----------------------------------------------------------------------------
def _attn_mlp_kernel(x_ref, g1_ref, be1_ref,
                     wq_ref, bq_ref, wkT_ref, bkT_ref, wv_ref, bv_ref,
                     wp_ref, bp_ref, g2_ref, be2_ref,
                     w1_ref, bm1_ref, w2_ref, bm2_ref,
                     o_ref, xn1_sc, k_sc, v_sc, *, num_heads):
    qi = pl.program_id(1)
    _, N, C = x_ref.shape
    tq = o_ref.shape[1]
    D = C // num_heads
    scale = float(D) ** -0.5
    bf16 = jnp.bfloat16

    # --- per-batch (qi == 0): LN1, K^T, V resident in VMEM scratch ---
    @pl.when(qi == 0)
    def _():
        g1 = g1_ref[0].astype(jnp.float32)
        be1 = be1_ref[0].astype(jnp.float32)
        xf = x_ref[0].astype(jnp.float32)                                  # (N, C)
        xn = _layernorm(xf, g1, be1).astype(bf16)
        xn1_sc[...] = xn
        # K^T = Wk^T @ xn^T  -> (C, N), reshaped (free, leading-dim split) to
        # (nh, D, N): QK^T contracts over sublanes, scores lane-dense over N.
        xnT = xn.T                                                         # (C, N)
        kT = jnp.dot(wkT_ref[...], xnT,
                     preferred_element_type=jnp.float32) + bkT_ref[...]
        k_sc[...] = kT.reshape(num_heads, D, N).astype(bf16)
        # V head-major (nh, N, D): direct rhs of the PV matmul.
        v = jnp.dot(xn, wv_ref[...],
                    preferred_element_type=jnp.float32) + bv_ref[0]
        v_sc[...] = jnp.transpose(v.reshape(N, num_heads, D), (1, 0, 2)).astype(bf16)

    row0 = pl.multiple_of(qi * tq, tq)
    xt = x_ref[0, pl.ds(row0, tq), :].astype(jnp.float32)                  # residual (tq, C)
    xn_t = xn1_sc[pl.ds(row0, tq), :]                                      # reuse LN1 (bf16)

    # --- attention (per-head matmuls from lane views of a lane-dense Q) ---
    q = jnp.dot(xn_t, wq_ref[...], preferred_element_type=jnp.float32) + bq_ref[0]
    q = (q * scale).astype(bf16)                                           # (tq, C)

    heads = []
    for h in range(num_heads):
        q_h = q[:, h * D:(h + 1) * D]                                      # (tq, D)
        s_h = jnp.dot(q_h, k_sc[h], preferred_element_type=jnp.float32)    # (tq, N)
        s_h = s_h - jnp.max(s_h, axis=-1, keepdims=True)
        p_h = jnp.exp(s_h)
        p_h = p_h * pl.reciprocal(jnp.sum(p_h, axis=-1, keepdims=True), approx=True)
        o_h = jnp.dot(p_h.astype(bf16), v_sc[h],
                      preferred_element_type=jnp.float32)                  # (tq, D)
        heads.append(o_h)
    attn = jnp.concatenate(heads, axis=-1).astype(bf16)                    # (tq, C)

    y = jnp.dot(attn, wp_ref[...], preferred_element_type=jnp.float32) + bp_ref[0]
    t = xt + y                                                             # residual 1

    # --- MLP ---
    g2 = g2_ref[0].astype(jnp.float32)
    be2 = be2_ref[0].astype(jnp.float32)
    xn2 = _layernorm(t, g2, be2).astype(bf16)
    hdn = jnp.dot(xn2, w1_ref[...], preferred_element_type=jnp.float32) + bm1_ref[0]
    # exact GELU (erf form) to match nn.GELU() default
    hdn = 0.5 * hdn * (1.0 + jax.lax.erf(hdn * (1.0 / math.sqrt(2.0))))
    yy = jnp.dot(hdn.astype(bf16), w2_ref[...],
                 preferred_element_type=jnp.float32) + bm2_ref[0]
    o_ref[0] = (t + yy).astype(o_ref.dtype)                                # residual 2


def _pick_row_tile(n, target=128):
    # largest divisor of n that is <= target and a multiple of 8 (sublane)
    for t in range(min(n, target), 7, -1):
        if n % t == 0 and t % 8 == 0:
            return t
    # fallback: single tile (fine for small N; for huge awkward N, pad N upstream)
    return n


def _build_attn_mlp_call(B, N, C, Hd, tq, num_heads, out_dtype, buffered_weights):
    nqt = N // tq
    D = C // num_heads
    w_mode = pl.Buffered(1) if buffered_weights else None

    def cspec(shape):
        idx = lambda b, q, _s=shape: (0,) * len(_s)
        if w_mode is None:
            return pl.BlockSpec(shape, idx)
        return pl.BlockSpec(shape, idx, pipeline_mode=w_mode)

    return pl.pallas_call(
        partial(_attn_mlp_kernel, num_heads=num_heads),
        out_shape=jax.ShapeDtypeStruct((B, N, C), out_dtype),
        grid=(B, nqt),
        in_specs=[
            pl.BlockSpec((1, N, C), lambda b, q: (b, 0, 0)),   # full token block (KV/LN1)
            cspec((1, C)), cspec((1, C)),                      # ln1 gamma/beta
            cspec((C, C)), cspec((1, C)),                      # wq, bq
            cspec((C, C)), cspec((C, 1)),                      # wk^T, bk^T
            cspec((C, C)), cspec((1, C)),                      # wv, bv
            cspec((C, C)), cspec((1, C)),                      # wproj, bproj
            cspec((1, C)), cspec((1, C)),                      # ln2 gamma/beta
            cspec((C, Hd)), cspec((1, Hd)),                    # w1, b1
            cspec((Hd, C)), cspec((1, C)),                     # w2, b2
        ],
        out_specs=pl.BlockSpec((1, tq, C), lambda b, q: (b, q, 0)),
        scratch_shapes=[
            pltpu.VMEM((N, C), jnp.bfloat16),                  # LN1(x), resident per batch
            pltpu.VMEM((num_heads, D, N), jnp.bfloat16),       # K^T head-major (N lane-dense)
            pltpu.VMEM((num_heads, N, D), jnp.bfloat16),       # V head-major
        ],
        compiler_params=pltpu.CompilerParams(
            # NOTE: q axis must stay "arbitrary" (sequential) so the qi==0 KV
            # projection runs before the other tiles of the same batch.
            dimension_semantics=("parallel", "arbitrary"),
            vmem_limit_bytes=_vmem_limit_bytes(),
        ),
    )


def attn_mlp_block(tokens, p, num_heads, tq_target=128):
    # tq_target=128 fills v5e's 128-deep MXU; on v6e (256-deep MXU, 128 MiB VMEM)
    # 256 is a good choice when N allows.
    B, N, C = tokens.shape
    Hd = p["w1"].shape[1]
    tq = _pick_row_tile(N, tq_target)

    bf16 = jnp.bfloat16
    wqkv, bqkv = p["wqkv"], p["bqkv"]
    args = (
        tokens, p["ln1_g"], p["ln1_b"],
        wqkv[:, :C].astype(bf16), bqkv[:, :C],                      # wq, bq
        wqkv[:, C:2 * C].T.astype(bf16), bqkv[:, C:2 * C].reshape(C, 1),   # wk^T, bk^T
        wqkv[:, 2 * C:].astype(bf16), bqkv[:, 2 * C:],              # wv, bv
        p["wproj"].astype(bf16), p["bproj"],
        p["ln2_g"], p["ln2_b"],
        p["w1"].astype(bf16), p["b1"],
        p["w2"].astype(bf16), p["b2"],
    )
    try:
        f = _build_attn_mlp_call(B, N, C, Hd, tq, num_heads, tokens.dtype, True)
        return f(*args)
    except Exception:
        # fallback if single-buffered (pl.Buffered(1)) weight blocks are rejected
        f = _build_attn_mlp_call(B, N, C, Hd, tq, num_heads, tokens.dtype, False)
        return f(*args)


# ----------------------------------------------------------------------------
# SABlock forward
# ----------------------------------------------------------------------------
def sablock_forward(x, params, num_heads):
    # x: (B, C, T, H, W)  -- PyTorch layout
    B, C, T, H, W = x.shape
    x_cl = jnp.transpose(x, (0, 2, 3, 4, 1))               # (B, T, H, W, C)
    x_cl = dwconv_residual(x_cl, params["pos_w"], params["pos_b"])
    tokens = x_cl.reshape(B, T * H * W, C)                 # == flatten(2).transpose(1,2)
    tokens = attn_mlp_block(tokens, params, num_heads)
    out = tokens.reshape(B, T, H, W, C)
    return jnp.transpose(out, (0, 4, 1, 2, 3))             # back to (B, C, T, H, W)


def init_params(key, dim):
    ks = jax.random.split(key, 8)
    s = 0.05
    return {
        # Conv3d(dim, dim, 3, 1, 1, groups=dim): weight (dim,1,3,3,3) stored as (27, dim)
        "pos_w": jax.random.normal(ks[0], (27, dim), jnp.float32) * s,
        "pos_b": jax.random.normal(ks[1], (1, dim), jnp.float32) * s,
        "ln1_g": jnp.ones((1, dim), jnp.float32),
        "ln1_b": jnp.zeros((1, dim), jnp.float32),
        # nn.Linear weights stored pre-transposed: (in, out)
        "wqkv": jax.random.normal(ks[2], (dim, 3 * dim), jnp.float32) * s,
        "bqkv": jax.random.normal(ks[3], (1, 3 * dim), jnp.float32) * s,
        "wproj": jax.random.normal(ks[4], (dim, dim), jnp.float32) * s,
        "bproj": jax.random.normal(ks[5], (1, dim), jnp.float32) * s,
        "ln2_g": jnp.ones((1, dim), jnp.float32),
        "ln2_b": jnp.zeros((1, dim), jnp.float32),
        "w1": jax.random.normal(ks[6], (dim, 4 * dim), jnp.float32) * s,
        "b1": jnp.zeros((1, 4 * dim), jnp.float32),
        "w2": jax.random.normal(ks[7], (4 * dim, dim), jnp.float32) * s,
        "b2": jnp.zeros((1, dim), jnp.float32),
    }


# ----------------------------------------------------------------------------
# pure-JAX f32 reference (same math) for a sanity check
# ----------------------------------------------------------------------------
def reference_forward(x, p, num_heads):
    B, C, T, H, W = x.shape
    x_cl = jnp.transpose(x, (0, 2, 3, 4, 1))
    xp = jnp.pad(x_cl, ((0, 0), (1, 1), (1, 1), (1, 1), (0, 0)))
    conv = jnp.zeros_like(x_cl)
    for kt in range(3):
        for kh in range(3):
            for kw in range(3):
                conv = conv + xp[:, kt:kt + T, kh:kh + H, kw:kw + W, :] * p["pos_w"][kt * 9 + kh * 3 + kw]
    x_cl = x_cl + conv + p["pos_b"][0]
    t = x_cl.reshape(B, T * H * W, C)

    def ln(z, g, b):
        mu = jnp.mean(z, -1, keepdims=True)
        var = jnp.mean((z - mu) ** 2, -1, keepdims=True)
        return (z - mu) * jax.lax.rsqrt(var + LN_EPS) * g + b

    D = C // num_heads
    xn = ln(t, p["ln1_g"][0], p["ln1_b"][0])
    qkv = xn @ p["wqkv"] + p["bqkv"][0]
    q = qkv[..., :C].reshape(B, -1, num_heads, D).transpose(0, 2, 1, 3)
    k = qkv[..., C:2 * C].reshape(B, -1, num_heads, D).transpose(0, 2, 1, 3)
    v = qkv[..., 2 * C:].reshape(B, -1, num_heads, D).transpose(0, 2, 1, 3)
    a = jax.nn.softmax(jnp.einsum("bhnd,bhmd->bhnm", q, k) * (D ** -0.5), axis=-1)
    o = jnp.einsum("bhnm,bhmd->bhnd", a, v).transpose(0, 2, 1, 3).reshape(B, -1, C)
    t = t + (o @ p["wproj"] + p["bproj"][0])

    xn = ln(t, p["ln2_g"][0], p["ln2_b"][0])
    h = xn @ p["w1"] + p["b1"][0]
    h = 0.5 * h * (1.0 + jax.lax.erf(h / math.sqrt(2.0)))
    t = t + (h @ p["w2"] + p["b2"][0])
    return jnp.transpose(t.reshape(B, T, H, W, C), (0, 4, 1, 2, 3))


if __name__ == "__main__":
    dim, num_heads = 128, 4          # C=128 keeps channel (lane) dim dense
    B, T, H, W = 2, 2, 4, 4          # N = T*H*W = 32 tokens

    key = jax.random.PRNGKey(0)
    kx, kp = jax.random.split(key)
    x = jax.random.normal(kx, (B, dim, T, H, W), jnp.float32)
    params = init_params(kp, dim)

    out = jax.block_until_ready(sablock_forward(x, params, num_heads))
    ref = reference_forward(x, params, num_heads)
    assert out.shape == (B, dim, T, H, W)
    err = float(jnp.max(jnp.abs(out - ref)))
    assert err < 5e-2, f"max abs err {err}"

    print("KERNEL_OK")
</pallas_src>

<mosaic_0001>
module attributes {stable_mosaic.version = 11 : i64} {
  func.func @_dwconv_residual_kernel(%arg0: i32, %arg1: memref<1x2x4x4x128xf32, #tpu.memory_space<vmem>>, %arg2: memref<27x128xf32, #tpu.memory_space<vmem>>, %arg3: memref<1x128xf32, #tpu.memory_space<vmem>>, %arg4: memref<1x2x4x4x128xf32, #tpu.memory_space<vmem>>, %arg5: memref<3x4x6x4x128xf32, #tpu.memory_space<vmem>>) attributes {dimension_semantics = [#tpu.dimension_semantics<parallel>], iteration_bounds = array<i64: 2>, scalar_prefetch = 0 : i64, scratch_operands = 1 : i64, tpu.core_type = #tpu.core_type<tc>, window_params = [{transform_indices = @transform_0, window_bounds = array<i64: 1, 2, 4, 4, 128>}, {pipeline_mode = #tpu.pipeline_mode<synchronous>, transform_indices = @transform_1, window_bounds = array<i64: 27, 128>}, {pipeline_mode = #tpu.pipeline_mode<synchronous>, transform_indices = @transform_2, window_bounds = array<i64: 1, 128>}, {transform_indices = @transform_3, window_bounds = array<i64: 1, 2, 4, 4, 128>}]} {
    %c0 = arith.constant 0 : index
    %c0_0 = arith.constant 0 : index
    %c0_1 = arith.constant 0 : index
    %c0_2 = arith.constant 0 : index
    %c0_3 = arith.constant 0 : index
    %0 = vector.load %arg1[%c0, %c0_0, %c0_1, %c0_2, %c0_3] : memref<1x2x4x4x128xf32, #tpu.memory_space<vmem>>, vector<1x2x4x4x128xf32>
    %1 = vector.shape_cast %0 : vector<1x2x4x4x128xf32> to vector<2x4x4x128xf32>
    %cst = arith.constant 0.000000e+00 : f32
    %2 = vector.broadcast %cst : f32 to vector<6x4x128xf32>
    %c0_4 = arith.constant 0 : index
    %c0_5 = arith.constant 0 : index
    %c0_6 = arith.constant 0 : index
    %c0_7 = arith.constant 0 : index
    %c0_8 = arith.constant 0 : index
    %3 = vector.load %arg5[%c0_4, %c0_5, %c0_6, %c0_7, %c0_8] : memref<3x4x6x4x128xf32, #tpu.memory_space<vmem>>, vector<1x1x6x4x128xf32>
    %4 = vector.shape_cast %3 : vector<1x1x6x4x128xf32> to vector<6x4x128xf32>
    %5 = vector.shape_cast %2 : vector<6x4x128xf32> to vector<1x1x6x4x128xf32>
    tpu.vector_store %arg5[%c0_4, %c0_5, %c0_6, %c0_7, %c0_8], %5 {strides = array<i32>} : memref<3x4x6x4x128xf32, #tpu.memory_space<vmem>>, vector<1x1x6x4x128xf32>,
    %cst_9 = arith.constant 0.000000e+00 : f32
    %6 = vector.broadcast %cst_9 : f32 to vector<6x4x128xf32>
    %c0_10 = arith.constant 0 : index
    %c3 = arith.constant 3 : index
    %c0_11 = arith.constant 0 : index
    %c0_12 = arith.constant 0 : index
    %c0_13 = arith.constant 0 : index
    %7 = vector.load %arg5[%c0_10, %c3, %c0_11, %c0_12, %c0_13] : memref<3x4x6x4x128xf32, #tpu.memory_space<vmem>>, vector<1x1x6x4x128xf32>
    %8 = vector.shape_cast %7 : vector<1x1x6x4x128xf32> to vector<6x4x128xf32>
    %9 = vector.shape_cast %6 : vector<6x4x128xf32> to vector<1x1x6x4x128xf32>
    tpu.vector_store %arg5[%c0_10, %c3, %c0_11, %c0_12, %c0_13], %9 {strides = array<i32>} : memref<3x4x6x4x128xf32, #tpu.memory_space<vmem>>, vector<1x1x6x4x128xf32>,
    %cst_14 = arith.constant 0.000000e+00 : f32
    %10 = vector.broadcast %cst_14 : f32 to vector<2x4x128xf32>
    %c0_15 = arith.constant 0 : index
    %c1 = arith.constant 1 : index
    %c0_16 = arith.constant 0 : index
    %c0_17 = arith.constant 0 : index
    %c0_18 = arith.constant 0 : index
    %11 = vector.load %arg5[%c0_15, %c1, %c0_16, %c0_17, %c0_18] : memref<3x4x6x4x128xf32, #tpu.memory_space<vmem>>, vector<1x2x1x4x128xf32>
    %12 = vector.shape_cast %11 : vector<1x2x1x4x128xf32> to vector<2x4x128xf32>
    %13 = vector.shape_cast %10 : vector<2x4x128xf32> to vector<1x2x1x4x128xf32>
    tpu.vector_store %arg5[%c0_15, %c1, %c0_16, %c0_17, %c0_18], %13 {strides = array<i32>} : memref<3x4x6x4x128xf32, #tpu.memory_space<vmem>>, vector<1x2x1x4x128xf32>,
    %cst_19 = arith.constant 0.000000e+00 : f32
    %14 = vector.broadcast %cst_19 : f32 to vector<2x4x128xf32>
    %c0_20 = arith.constant 0 : index
    %c1_21 = arith.constant 1 : index
    %c5 = arith.constant 5 : index
    %c0_22 = arith.constant 0 : index
    %c0_23 = arith.constant 0 : index
    %15 = vector.load %arg5[%c0_20, %c1_21, %c5, %c0_22, %c0_23] : memref<3x4x6x4x128xf32, #tpu.memory_space<vmem>>, vector<1x2x1x4x128xf32>
    %16 = vector.shape_cast %15 : vector<1x2x1x4x128xf32> to vector<2x4x128xf32>
    %17 = vector.shape_cast %14 : vector<2x4x128xf32> to vector<1x2x1x4x128xf32>
    tpu.vector_store %arg5[%c0_20, %c1_21, %c5, %c0_22, %c0_23], %17 {strides = array<i32>} : memref<3x4x6x4x128xf32, #tpu.memory_space<vmem>>, vector<1x2x1x4x128xf32>,
    %cst_24 = arith.constant 0.000000e+00 : f32
    %18 = vector.broadcast %cst_24 : f32 to vector<6x4x128xf32>
    %c1_25 = arith.constant 1 : index
    %c0_26 = arith.constant 0 : index
    %c0_27 = arith.constant 0 : index
    %c0_28 = arith.constant 0 : index
    %c0_29 = arith.constant 0 : index
    %19 = vector.load %arg5[%c1_25, %c0_26, %c0_27, %c0_28, %c0_29] : memref<3x4x6x4x128xf32, #tpu.memory_space<vmem>>, vector<1x1x6x4x128xf32>
    %20 = vector.shape_cast %19 : vector<1x1x6x4x128xf32> to vector<6x4x128xf32>
    %21 = vector.shape_cast %18 : vector<6x4x128xf32> to vector<1x1x6x4x128xf32>
    tpu.vector_store %arg5[%c1_25, %c0_26, %c0_27, %c0_28, %c0_29], %21 {strides = array<i32>} : memref<3x4x6x4x128xf32, #tpu.memory_space<vmem>>, vector<1x1x6x4x128xf32>,
    %cst_30 = arith.constant 0.000000e+00 : f32
    %22 = vector.broadcast %cst_30 : f32 to vector<6x4x128xf32>
    %c1_31 = arith.constant 1 : index
    %c3_32 = arith.constant 3 : index
    %c0_33 = arith.constant 0 : index
    %c0_34 = arith.constant 0 : index
    %c0_35 = arith.constant 0 : index
    %23 = vector.load %arg5[%c1_31, %c3_32, %c0_33, %c0_34, %c0_35] : memref<3x4x6x4x128xf32, #tpu.memory_space<vmem>>, vector<1x1x6x4x128xf32>
    %24 = vector.shape_cast %23 : vector<1x1x6x4x128xf32> to vector<6x4x128xf32>
    %25 = vector.shape_cast %22 : vector<6x4x128xf32> to vector<1x1x6x4x128xf32>
    tpu.vector_store %arg5[%c1_31, %c3_32, %c0_33, %c0_34, %c0_35], %25 {strides = array<i32>} : memref<3x4x6x4x128xf32, #tpu.memory_space<vmem>>, vector<1x1x6x4x128xf32>,
    %cst_36 = arith.constant 0.000000e+00 : f32
    %26 = vector.broadcast %cst_36 : f32 to vector<2x4x128xf32>
    %c1_37 = arith.constant 1 : index
    %c1_38 = arith.constant 1 : index
    %c0_39 = arith.constant 0 : index
    %c0_40 = arith.constant 0 : index
    %c0_41 = arith.constant 0 : index
    %27 = vector.load %arg5[%c1_37, %c1_38, %c0_39, %c0_40, %c0_41] : memref<3x4x6x4x128xf32, #tpu.memory_space<vmem>>, vector<1x2x1x4x128xf32>
    %28 = vector.shape_cast %27 : vector<1x2x1x4x128xf32> to vector<2x4x128xf32>
    %29 = vector.shape_cast %26 : vector<2x4x128xf32> to vector<1x2x1x4x128xf32>
    tpu.vector_store %arg5[%c1_37, %c1_38, %c0_39, %c0_40, %c0_41], %29 {strides = array<i32>} : memref<3x4x6x4x128xf32, #tpu.memory_space<vmem>>, vector<1x2x1x4x128xf32>,
    %cst_42 = arith.constant 0.000000e+00 : f32
    %30 = vector.broadcast %cst_42 : f32 to vector<2x4x128xf32>
    %c1_43 = arith.constant 1 : index
    %c1_44 = arith.constant 1 : index
    %c5_45 = arith.constant 5 : index
    %c0_46 = arith.constant 0 : index
    %c0_47 = arith.constant 0 : index
    %31 = vector.load %arg5[%c1_43, %c1_44, %c5_45, %c0_46, %c0_47] : memref<3x4x6x4x128xf32, #tpu.memory_space<vmem>>, vector<1x2x1x4x128xf32>
    %32 = vector.shape_cast %31 : vector<1x2x1x4x128xf32> to vector<2x4x128xf32>
    %33 = vector.shape_cast %30 : vector<2x4x128xf32> to vector<1x2x1x4x128xf32>
    tpu.vector_store %arg5[%c1_43, %c1_44, %c5_45, %c0_46, %c0_47], %33 {strides = array<i32>} : memref<3x4x6x4x128xf32, #tpu.memory_space<vmem>>, vector<1x2x1x4x128xf32>,
    %cst_48 = arith.constant 0.000000e+00 : f32
    %34 = vector.broadcast %cst_48 : f32 to vector<6x4x128xf32>
    %c2 = arith.constant 2 : index
    %c0_49 = arith.constant 0 : index
    %c0_50 = arith.constant 0 : index
    %c0_51 = arith.constant 0 : index
    %c0_52 = arith.constant 0 : index
    %35 = vector.load %arg5[%c2, %c0_49, %c0_50, %c0_51, %c0_52] : memref<3x4x6x4x128xf32, #tpu.memory_space<vmem>>, vector<1x1x6x4x128xf32>
    %36 = vector.shape_cast %35 : vector<1x1x6x4x128xf32> to vector<6x4x128xf32>
    %37 = vector.shape_cast %34 : vector<6x4x128xf32> to vector<1x1x6x4x128xf32>
    tpu.vector_store %arg5[%c2, %c0_49, %c0_50, %c0_51, %c0_52], %37 {strides = array<i32>} : memref<3x4x6x4x128xf32, #tpu.memory_space<vmem>>, vector<1x1x6x4x128xf32>,
    %cst_53 = arith.constant 0.000000e+00 : f32
    %38 = vector.broadcast %cst_53 : f32 to vector<6x4x128xf32>
    %c2_54 = arith.constant 2 : index
    %c3_55 = arith.constant 3 : index
    %c0_56 = arith.constant 0 : index
    %c0_57 = arith.constant 0 : index
    %c0_58 = arith.constant 0 : index
    %39 = vector.load %arg5[%c2_54, %c3_55, %c0_56, %c0_57, %c0_58] : memref<3x4x6x4x128xf32, #tpu.memory_space<vmem>>, vector<1x1x6x4x128xf32>
    %40 = vector.shape_cast %39 : vector<1x1x6x4x128xf32> to vector<6x4x128xf32>
    %41 = vector.shape_cast %38 : vector<6x4x128xf32> to vector<1x1x6x4x128xf32>
    tpu.vector_store %arg5[%c2_54, %c3_55, %c0_56, %c0_57, %c0_58], %41 {strides = array<i32>} : memref<3x4x6x4x128xf32, #tpu.memory_space<vmem>>, vector<1x1x6x4x128xf32>,
    %cst_59 = arith.constant 0.000000e+00 : f32
    %42 = vector.broadcast %cst_59 : f32 to vector<2x4x128xf32>
    %c2_60 = arith.constant 2 : index
    %c1_61 = arith.constant 1 : index
    %c0_62 = arith.constant 0 : index
    %c0_63 = arith.constant 0 : index
    %c0_64 = arith.constant 0 : index
    %43 = vector.load %arg5[%c2_60, %c1_61, %c0_62, %c0_63, %c0_64] : memref<3x4x6x4x128xf32, #tpu.memory_space<vmem>>, vector<1x2x1x4x128xf32>
    %44 = vector.shape_cast %43 : vector<1x2x1x4x128xf32> to vector<2x4x128xf32>
    %45 = vector.shape_cast %42 : vector<2x4x128xf32> to vector<1x2x1x4x128xf32>
    tpu.vector_store %arg5[%c2_60, %c1_61, %c0_62, %c0_63, %c0_64], %45 {strides = array<i32>} : memref<3x4x6x4x128xf32, #tpu.memory_space<vmem>>, vector<1x2x1x4x128xf32>,
    %cst_65 = arith.constant 0.000000e+00 : f32
    %46 = vector.broadcast %cst_65 : f32 to vector<2x4x128xf32>
    %c2_66 = arith.constant 2 : index
    %c1_67 = arith.constant 1 : index
    %c5_68 = arith.constant 5 : index
    %c0_69 = arith.constant 0 : index
    %c0_70 = arith.constant 0 : index
    %47 = vector.load %arg5[%c2_66, %c1_67, %c5_68, %c0_69, %c0_70] : memref<3x4x6x4x128xf32, #tpu.memory_space<vmem>>, vector<1x2x1x4x128xf32>
    %48 = vector.shape_cast %47 : vector<1x2x1x4x128xf32> to vector<2x4x128xf32>
    %49 = vector.shape_cast %46 : vector<2x4x128xf32> to vector<1x2x1x4x128xf32>
    tpu.vector_store %arg5[%c2_66, %c1_67, %c5_68, %c0_69, %c0_70], %49 {strides = array<i32>} : memref<3x4x6x4x128xf32, #tpu.memory_space<vmem>>, vector<1x2x1x4x128xf32>,
    %cst_71 = arith.constant 0.000000e+00 : f32
    %50 = vector.broadcast %cst_71 : f32 to vector<2x4x1x128xf32>
    %c1_72 = arith.constant 1 : index
    %c1_73 = arith.constant 1 : index
    %c1_74 = arith.constant 1 : index
    %c0_75 = arith.constant 0 : index
    %c0_76 = arith.constant 0 : index
    %51 = vector.load %arg5[%c1_72, %c1_73, %c1_74, %c0_75, %c0_76] : memref<3x4x6x4x128xf32, #tpu.memory_space<vmem>>, vector<1x2x4x4x128xf32>
    %52 = vector.shape_cast %51 : vector<1x2x4x4x128xf32> to vector<2x4x4x128xf32>
    %53 = vector.shape_cast %1 : vector<2x4x4x128xf32> to vector<1x2x4x4x128xf32>
    tpu.vector_store %arg5[%c1_72, %c1_73, %c1_74, %c0_75, %c0_76], %53 {strides = array<i32>} : memref<3x4x6x4x128xf32, #tpu.memory_space<vmem>>, vector<1x2x4x4x128xf32>,
    %c0_77 = arith.constant 0 : index
    %c1_78 = arith.constant 1 : index
    %c1_79 = arith.constant 1 : index
    %c0_80 = arith.constant 0 : index
    %c0_81 = arith.constant 0 : index
    %54 = vector.load %arg5[%c0_77, %c1_78, %c1_79, %c0_80, %c0_81] : memref<3x4x6x4x128xf32, #tpu.memory_space<vmem>>, vector<1x2x4x1x128xf32>
    %55 = vector.shape_cast %54 : vector<1x2x4x1x128xf32> to vector<2x4x1x128xf32>
    %56 = vector.shape_cast %50 : vector<2x4x1x128xf32> to vector<1x2x4x1x128xf32>
    tpu.vector_store %arg5[%c0_77, %c1_78, %c1_79, %c0_80, %c0_81], %56 {strides = array<i32>} : memref<3x4x6x4x128xf32, #tpu.memory_space<vmem>>, vector<1x2x4x1x128xf32>,
    %57 = vector.extract_strided_slice %1 {offsets = [0, 0, 0, 0], sizes = [2, 4, 3, 128], strides = [1, 1, 1, 1]} : vector<2x4x4x128xf32> to vector<2x4x3x128xf32>
    %c0_82 = arith.constant 0 : index
    %c1_83 = arith.constant 1 : index
    %c1_84 = arith.constant 1 : index
    %c1_85 = arith.constant 1 : index
    %c0_86 = arith.constant 0 : index
    %58 = vector.load %arg5[%c0_82, %c1_83, %c1_84, %c1_85, %c0_86] : memref<3x4x6x4x128xf32, #tpu.memory_space<vmem>>, vector<1x2x4x3x128xf32>
    %59 = vector.shape_cast %58 : vector<1x2x4x3x128xf32> to vector<2x4x3x128xf32>
    %60 = vector.shape_cast %57 : vector<2x4x3x128xf32> to vector<1x2x4x3x128xf32>
    tpu.vector_store %arg5[%c0_82, %c1_83, %c1_84, %c1_85, %c0_86], %60 {strides = array<i32>} : memref<3x4x6x4x128xf32, #tpu.memory_space<vmem>>, vector<1x2x4x3x128xf32>,
    %c2_87 = arith.constant 2 : index
    %c1_88 = arith.constant 1 : index
    %c1_89 = arith.constant 1 : index
    %c3_90 = arith.constant 3 : index
    %c0_91 = arith.constant 0 : index
    %61 = vector.load %arg5[%c2_87, %c1_88, %c1_89, %c3_90, %c0_91] : memref<3x4x6x4x128xf32, #tpu.memory_space<vmem>>, vector<1x2x4x1x128xf32>
    %62 = vector.shape_cast %61 : vector<1x2x4x1x128xf32> to vector<2x4x1x128xf32>
    %63 = vector.shape_cast %50 : vector<2x4x1x128xf32> to vector<1x2x4x1x128xf32>
    tpu.vector_store %arg5[%c2_87, %c1_88, %c1_89, %c3_90, %c0_91], %63 {strides = array<i32>} : memref<3x4x6x4x128xf32, #tpu.memory_space<vmem>>, vector<1x2x4x1x128xf32>,
    %64 = vector.extract_strided_slice %1 {offsets = [0, 0, 1, 0], sizes = [2, 4, 3, 128], strides = [1, 1, 1, 1]} : vector<2x4x4x128xf32> to vector<2x4x3x128xf32>
    %c2_92 = arith.constant 2 : index
    %c1_93 = arith.constant 1 : index
    %c1_94 = arith.constant 1 : index
    %c0_95 = arith.constant 0 : index
    %c0_96 = arith.constant 0 : index
    %65 = vector.load %arg5[%c2_92, %c1_93, %c1_94, %c0_95, %c0_96] : memref<3x4x6x4x128xf32, #tpu.memory_space<vmem>>, vector<1x2x4x3x128xf32>
    %66 = vector.shape_cast %65 : vector<1x2x4x3x128xf32> to vector<2x4x3x128xf32>
    %67 = vector.shape_cast %64 : vector<2x4x3x128xf32> to vector<1x2x4x3x128xf32>
    tpu.vector_store %arg5[%c2_92, %c1_93, %c1_94, %c0_95, %c0_96], %67 {strides = array<i32>} : memref<3x4x6x4x128xf32, #tpu.memory_space<vmem>>, vector<1x2x4x3x128xf32>,
    %cst_97 = arith.constant 0.000000e+00 : f32
    %68 = vector.broadcast %cst_97 : f32 to vector<2x4x4x128xf32>
    %c0_98 = arith.constant 0 : index
    %c0_99 = arith.constant 0 : index
    %69 = vector.load %arg2[%c0_98, %c0_99] : memref<27x128xf32, #tpu.memory_space<vmem>>, vector<1x128xf32>
    %70 = vector.shape_cast %69 : vector<1x128xf32> to vector<128xf32>
    %c0_100 = arith.constant 0 : index
    %c0_101 = arith.constant 0 : index
    %c0_102 = arith.constant 0 : index
    %c0_103 = arith.constant 0 : index
    %c0_104 = arith.constant 0 : index
    %71 = vector.load %arg5[%c0_100, %c0_101, %c0_102, %c0_103, %c0_104] : memref<3x4x6x4x128xf32, #tpu.memory_space<vmem>>, vector<1x2x4x4x128xf32>
    %72 = vector.shape_cast %71 : vector<1x2x4x4x128xf32> to vector<2x4x4x128xf32>
    %73 = vector.shape_cast %70 : vector<128xf32> to vector<1x1x1x128xf32>
    %74 = vector.broadcast %73 : vector<1x1x1x128xf32> to vector<2x4x4x128xf32>
    %75 = arith.mulf %72, %74 : vector<2x4x4x128xf32>
    %76 = arith.addf %68, %75 : vector<2x4x4x128xf32>
    %c1_105 = arith.constant 1 : index
    %c0_106 = arith.constant 0 : index
    %77 = vector.load %arg2[%c1_105, %c0_106] : memref<27x128xf32, #tpu.memory_space<vmem>>, vector<1x128xf32>
    %78 = vector.shape_cast %77 : vector<1x128xf32> to vector<128xf32>
    %c1_107 = arith.constant 1 : index
    %c0_108 = arith.constant 0 : index
    %c0_109 = arith.constant 0 : index
    %c0_110 = arith.constant 0 : index
    %c0_111 = arith.constant 0 : index
    %79 = vector.load %arg5[%c1_107, %c0_108, %c0_109, %c0_110, %c0_111] : memref<3x4x6x4x128xf32, #tpu.memory_space<vmem>>, vector<1x2x4x4x128xf32>
    %80 = vector.shape_cast %79 : vector<1x2x4x4x128xf32> to vector<2x4x4x128xf32>
    %81 = vector.shape_cast %78 : vector<128xf32> to vector<1x1x1x128xf32>
    %82 = vector.broadcast %81 : vector<1x1x1x128xf32> to vector<2x4x4x128xf32>
    %83 = arith.mulf %80, %82 : vector<2x4x4x128xf32>
    %84 = arith.addf %76, %83 : vector<2x4x4x128xf32>
    %c2_112 = arith.constant 2 : index
    %c0_113 = arith.constant 0 : index
    %85 = vector.load %arg2[%c2_112, %c0_113] : memref<27x128xf32, #tpu.memory_space<vmem>>, vector<1x128xf32>
    %86 = vector.shape_cast %85 : vector<1x128xf32> to vector<128xf32>
    %c2_114 = arith.constant 2 : index
    %c0_115 = arith.constant 0 : index
    %c0_116 = arith.constant 0 : index
    %c0_117 = arith.constant 0 : index
    %c0_118 = arith.constant 0 : index
    %87 = vector.load %arg5[%c2_114, %c0_115, %c0_116, %c0_117, %c0_118] : memref<3x4x6x4x128xf32, #tpu.memory_space<vmem>>, vector<1x2x4x4x128xf32>
    %88 = vector.shape_cast %87 : vector<1x2x4x4x128xf32> to vector<2x4x4x128xf32>
    %89 = vector.shape_cast %86 : vector<128xf32> to vector<1x1x1x128xf32>
    %90 = vector.broadcast %89 : vector<1x1x1x128xf32> to vector<2x4x4x128xf32>
    %91 = arith.mulf %88, %90 : vector<2x4x4x128xf32>
    %92 = arith.addf %84, %91 : vector<2x4x4x128xf32>
    %c3_119 = arith.constant 3 : index
    %c0_120 = arith.constant 0 : index
    %93 = vector.load %arg2[%c3_119, %c0_120] : memref<27x128xf32, #tpu.memory_space<vmem>>, vector<1x128xf32>
    %94 = vector.shape_cast %93 : vector<1x128xf32> to vector<128xf32>
    %c0_121 = arith.constant 0 : index
    %c0_122 = arith.constant 0 : index
    %c1_123 = arith.constant 1 : index
    %c0_124 = arith.constant 0 : index
    %c0_125 = arith.constant 0 : index
    %95 = vector.load %arg5[%c0_121, %c0_122, %c1_123, %c0_124, %c0_125] : memref<3x4x6x4x128xf32, #tpu.memory_space<vmem>>, vector<1x2x4x4x128xf32>
    %96 = vector.shape_cast %95 : vector<1x2x4x4x128xf32> to vector<2x4x4x128xf32>
    %97 = vector.shape_cast %94 : vector<128xf32> to vector<1x1x1x128xf32>
    %98 = vector.broadcast %97 : vector<1x1x1x128xf32> to vector<2x4x4x128xf32>
    %99 = arith.mulf %96, %98 : vector<2x4x4x128xf32>
    %100 = arith.addf %92, %99 : vector<2x4x4x128xf32>
    %c4 = arith.constant 4 : index
    %c0_126 = arith.constant 0 : index
    %101 = vector.load %arg2[%c4, %c0_126] : memref<27x128xf32, #tpu.memory_space<vmem>>, vector<1x128xf32>
    %102 = vector.shape_cast %101 : vector<1x128xf32> to vector<128xf32>
    %c1_127 = arith.constant 1 : index
    %c0_128 = arith.constant 0 : index
    %c1_129 = arith.constant 1 : index
    %c0_130 = arith.constant 0 : index
    %c0_131 = arith.constant 0 : index
    %103 = vector.load %arg5[%c1_127, %c0_128, %c1_129, %c0_130, %c0_131] : memref<3x4x6x4x128xf32, #tpu.memory_space<vmem>>, vector<1x2x4x4x128xf32>
    %104 = vector.shape_cast %103 : vector<1x2x4x4x128xf32> to vector<2x4x4x128xf32>
    %105 = vector.shape_cast %102 : vector<128xf32> to vector<1x1x1x128xf32>
    %106 = vector.broadcast %105 : vector<1x1x1x128xf32> to vector<2x4x4x128xf32>
    %107 = arith.mulf %104, %106 : vector<2x4x4x128xf32>
    %108 = arith.addf %100, %107 : vector<2x4x4x128xf32>
    %c5_132 = arith.constant 5 : index
    %c0_133 = arith.constant 0 : index
    %109 = vector.load %arg2[%c5_132, %c0_133] : memref<27x128xf32, #tpu.memory_space<vmem>>, vector<1x128xf32>
    %110 = vector.shape_cast %109 : vector<1x128xf32> to vector<128xf32>
    %c2_134 = arith.constant 2 : index
    %c0_135 = arith.constant 0 : index
    %c1_136 = arith.constant 1 : index
    %c0_137 = arith.constant 0 : index
    %c0_138 = arith.constant 0 : index
    %111 = vector.load %arg5[%c2_134, %c0_135, %c1_136, %c0_137, %c0_138] : memref<3x4x6x4x128xf32, #tpu.memory_space<vmem>>, vector<1x2x4x4x128xf32>
    %112 = vector.shape_cast %111 : vector<1x2x4x4x128xf32> to vector<2x4x4x128xf32>
    %113 = vector.shape_cast %110 : vector<128xf32> to vector<1x1x1x128xf32>
    %114 = vector.broadcast %113 : vector<1x1x1x128xf32> to vector<2x4x4x128xf32>
    %115 = arith.mulf %112, %114 : vector<2x4x4x128xf32>
    %116 = arith.addf %108, %115 : vector<2x4x4x128xf32>
    %c6 = arith.constant 6 : index
    %c0_139 = arith.constant 0 : index
    %117 = vector.load %arg2[%c6, %c0_139] : memref<27x128xf32, #tpu.memory_space<vmem>>, vector<1x128xf32>
    %118 = vector.shape_cast %117 : vector<1x128xf32> to vector<128xf32>
    %c0_140 = arith.constant 0 : index
    %c0_141 = arith.constant 0 : index
    %c2_142 = arith.constant 2 : index
    %c0_143 = arith.constant 0 : index
    %c0_144 = arith.constant 0 : index
    %119 = vector.load %arg5[%c0_140, %c0_141, %c2_142, %c0_143, %c0_144] : memref<3x4x6x4x128xf32, #tpu.memory_space<vmem>>, vector<1x2x4x4x128xf32>
    %120 = vector.shape_cast %119 : vector<1x2x4x4x128xf32> to vector<2x4x4x128xf32>
    %121 = vector.shape_cast %118 : vector<128xf32> to vector<1x1x1x128xf32>
    %122 = vector.broadcast %121 : vector<1x1x1x128xf32> to vector<2x4x4x128xf32>
    %123 = arith.mulf %120, %122 : vector<2x4x4x128xf32>
    %124 = arith.addf %116, %123 : vector<2x4x4x128xf32>
    %c7 = arith.constant 7 : index
    %c0_145 = arith.constant 0 : index
    %125 = vector.load %arg2[%c7, %c0_145] : memref<27x128xf32, #tpu.memory_space<vmem>>, vector<1x128xf32>
    %126 = vector.shape_cast %125 : vector<1x128xf32> to vector<128xf32>
    %c1_146 = arith.constant 1 : index
    %c0_147 = arith.constant 0 : index
    %c2_148 = arith.constant 2 : index
    %c0_149 = arith.constant 0 : index
    %c0_150 = arith.constant 0 : index
    %127 = vector.load %arg5[%c1_146, %c0_147, %c2_148, %c0_149, %c0_150] : memref<3x4x6x4x128xf32, #tpu.memory_space<vmem>>, vector<1x2x4x4x128xf32>
    %128 = vector.shape_cast %127 : vector<1x2x4x4x128xf32> to vector<2x4x4x128xf32>
    %129 = vector.shape_cast %126 : vector<128xf32> to vector<1x1x1x128xf32>
    %130 = vector.broadcast %129 : vector<1x1x1x128xf32> to vector<2x4x4x128xf32>
    %131 = arith.mulf %128, %130 : vector<2x4x4x128xf32>
    %132 = arith.addf %124, %131 : vector<2x4x4x128xf32>
    %c8 = arith.constant 8 : index
    %c0_151 = arith.constant 0 : index
    %133 = vector.load %arg2[%c8, %c0_151] : memref<27x128xf32, #tpu.memory_space<vmem>>, vector<1x128xf32>
    %134 = vector.shape_cast %133 : vector<1x128xf32> to vector<128xf32>
    %c2_152 = arith.constant 2 : index
    %c0_153 = arith.constant 0 : index
    %c2_154 = arith.constant 2 : index
    %c0_155 = arith.constant 0 : index
    %c0_156 = arith.constant 0 : index
    %135 = vector.load %arg5[%c2_152, %c0_153, %c2_154, %c0_155, %c0_156] : memref<3x4x6x4x128xf32, #tpu.memory_space<vmem>>, vector<1x2x4x4x128xf32>
    %136 = vector.shape_cast %135 : vector<1x2x4x4x128xf32> to vector<2x4x4x128xf32>
    %137 = vector.shape_cast %134 : vector<128xf32> to vector<1x1x1x128xf32>
    %138 = vector.broadcast %137 : vector<1x1x1x128xf32> to vector<2x4x4x128xf32>
    %139 = arith.mulf %136, %138 : vector<2x4x4x128xf32>
    %140 = arith.addf %132, %139 : vector<2x4x4x128xf32>
    %c9 = arith.constant 9 : index
    %c0_157 = arith.constant 0 : index
    %141 = vector.load %arg2[%c9, %c0_157] : memref<27x128xf32, #tpu.memory_space<vmem>>, vector<1x128xf32>
    %142 = vector.shape_cast %141 : vector<1x128xf32> to vector<128xf32>
    %c0_158 = arith.constant 0 : index
    %c1_159 = arith.constant 1 : index
    %c0_160 = arith.constant 0 : index
    %c0_161 = arith.constant 0 : index
    %c0_162 = arith.constant 0 : index
    %143 = vector.load %arg5[%c0_158, %c1_159, %c0_160, %c0_161, %c0_162] : memref<3x4x6x4x128xf32, #tpu.memory_space<vmem>>, vector<1x2x4x4x128xf32>
    %144 = vector.shape_cast %143 : vector<1x2x4x4x128xf32> to vector<2x4x4x128xf32>
    %145 = vector.shape_cast %142 : vector<128xf32> to vector<1x1x1x128xf32>
    %146 = vector.broadcast %145 : vector<1x1x1x128xf32> to vector<2x4x4x128xf32>
    %147 = arith.mulf %144, %146 : vector<2x4x4x128xf32>
    %148 = arith.addf %140, %147 : vector<2x4x4x128xf32>
    %c10 = arith.constant 10 : index
    %c0_163 = arith.constant 0 : index
    %149 = vector.load %arg2[%c10, %c0_163] : memref<27x128xf32, #tpu.memory_space<vmem>>, vector<1x128xf32>
    %150 = vector.shape_cast %149 : vector<1x128xf32> to vector<128xf32>
    %c1_164 = arith.constant 1 : index
    %c1_165 = arith.constant 1 : index
    %c0_166 = arith.constant 0 : index
    %c0_167 = arith.constant 0 : index
    %c0_168 = arith.constant 0 : index
    %151 = vector.load %arg5[%c1_164, %c1_165, %c0_166, %c0_167, %c0_168] : memref<3x4x6x4x128xf32, #tpu.memory_space<vmem>>, vector<1x2x4x4x128xf32>
    %152 = vector.shape_cast %151 : vector<1x2x4x4x128xf32> to vector<2x4x4x128xf32>
    %153 = vector.shape_cast %150 : vector<128xf32> to vector<1x1x1x128xf32>
    %154 = vector.broadcast %153 : vector<1x1x1x128xf32> to vector<2x4x4x128xf32>
    %155 = arith.mulf %152, %154 : vector<2x4x4x128xf32>
    %156 = arith.addf %148, %155 : vector<2x4x4x128xf32>
    %c11 = arith.constant 11 : index
    %c0_169 = arith.constant 0 : index
    %157 = vector.load %arg2[%c11, %c0_169] : memref<27x128xf32, #tpu.memory_space<vmem>>, vector<1x128xf32>
    %158 = vector.shape_cast %157 : vector<1x128xf32> to vector<128xf32>
    %c2_170 = arith.constant 2 : index
    %c1_171 = arith.constant 1 : index
    %c0_172 = arith.constant 0 : index
    %c0_173 = arith.constant 0 : index
    %c0_174 = arith.constant 0 : index
    %159 = vector.load %arg5[%c2_170, %c1_171, %c0_172, %c0_173, %c0_174] : memref<3x4x6x4x128xf32, #tpu.memory_space<vmem>>, vector<1x2x4x4x128xf32>
    %160 = vector.shape_cast %159 : vector<1x2x4x4x128xf32> to vector<2x4x4x128xf32>
    %161 = vector.shape_cast %158 : vector<128xf32> to vector<1x1x1x128xf32>
    %162 = vector.broadcast %161 : vector<1x1x1x128xf32> to vector<2x4x4x128xf32>
    %163 = arith.mulf %160, %162 : vector<2x4x4x128xf32>
    %164 = arith.addf %156, %163 : vector<2x4x4x128xf32>
    %c12 = arith.constant 12 : index
    %c0_175 = arith.constant 0 : index
    %165 = vector.load %arg2[%c12, %c0_175] : memref<27x128xf32, #tpu.memory_space<vmem>>, vector<1x128xf32>
    %166 = vector.shape_cast %165 : vector<1x128xf32> to vector<128xf32>
    %c0_176 = arith.constant 0 : index
    %c1_177 = arith.constant 1 : index
    %c1_178 = arith.constant 1 : index
    %c0_179 = arith.constant 0 : index
    %c0_180 = arith.constant 0 : index
    %167 = vector.load %arg5[%c0_176, %c1_177, %c1_178, %c0_179, %c0_180] : memref<3x4x6x4x128xf32, #tpu.memory_space<vmem>>, vector<1x2x4x4x128xf32>
    %168 = vector.shape_cast %167 : vector<1x2x4x4x128xf32> to vector<2x4x4x128xf32>
    %169 = vector.shape_cast %166 : vector<128xf32> to vector<1x1x1x128xf32>
    %170 = vector.broadcast %169 : vector<1x1x1x128xf32> to vector<2x4x4x128xf32>
    %171 = arith.mulf %168, %170 : vector<2x4x4x128xf32>
    %172 = arith.addf %164, %171 : vector<2x4x4x128xf32>
    %c13 = arith.constant 13 : index
    %c0_181 = arith.constant 0 : index
    %173 = vector.load %arg2[%c13, %c0_181] : memref<27x128xf32, #tpu.memory_space<vmem>>, vector<1x128xf32>
    %174 = vector.shape_cast %173 : vector<1x128xf32> to vector<128xf32>
    %c1_182 = arith.constant 1 : index
    %c1_183 = arith.constant 1 : index
    %c1_184 = arith.constant 1 : index
    %c0_185 = arith.constant 0 : index
    %c0_186 = arith.constant 0 : index
    %175 = vector.load %arg5[%c1_182, %c1_183, %c1_184, %c0_185, %c0_186] : memref<3x4x6x4x128xf32, #tpu.memory_space<vmem>>, vector<1x2x4x4x128xf32>
    %176 = vector.shape_cast %175 : vector<1x2x4x4x128xf32> to vector<2x4x4x128xf32>
    %177 = vector.shape_cast %174 : vector<128xf32> to vector<1x1x1x128xf32>
    %178 = vector.broadcast %177 : vector<1x1x1x128xf32> to vector<2x4x4x128xf32>
    %179 = arith.mulf %176, %178 : vector<2x4x4x128xf32>
    %180 = arith.addf %172, %179 : vector<2x4x4x128xf32>
    %c14 = arith.constant 14 : index
    %c0_187 = arith.constant 0 : index
    %181 = vector.load %arg2[%c14, %c0_187] : memref<27x128xf32, #tpu.memory_space<vmem>>, vector<1x128xf32>
    %182 = vector.shape_cast %181 : vector<1x128xf32> to vector<128xf32>
    %c2_188 = arith.constant 2 : index
    %c1_189 = arith.constant 1 : index
    %c1_190 = arith.constant 1 : index
    %c0_191 = arith.constant 0 : index
    %c0_192 = arith.constant 0 : index
    %183 = vector.load %arg5[%c2_188, %c1_189, %c1_190, %c0_191, %c0_192] : memref<3x4x6x4x128xf32, #tpu.memory_space<vmem>>, vector<1x2x4x4x128xf32>
    %184 = vector.shape_cast %183 : vector<1x2x4x4x128xf32> to vector<2x4x4x128xf32>
    %185 = vector.shape_cast %182 : vector<128xf32> to vector<1x1x1x128xf32>
    %186 = vector.broadcast %185 : vector<1x1x1x128xf32> to vector<2x4x4x128xf32>
    %187 = arith.mulf %184, %186 : vector<2x4x4x128xf32>
    %188 = arith.addf %180, %187 : vector<2x4x4x128xf32>
    %c15 = arith.constant 15 : index
    %c0_193 = arith.constant 0 : index
    %189 = vector.load %arg2[%c15, %c0_193] : memref<27x128xf32, #tpu.memory_space<vmem>>, vector<1x128xf32>
    %190 = vector.shape_cast %189 : vector<1x128xf32> to vector<128xf32>
    %c0_194 = arith.constant 0 : index
    %c1_195 = arith.constant 1 : index
    %c2_196 = arith.constant 2 : index
    %c0_197 = arith.constant 0 : index
    %c0_198 = arith.constant 0 : index
    %191 = vector.load %arg5[%c0_194, %c1_195, %c2_196, %c0_197, %c0_198] : memref<3x4x6x4x128xf32, #tpu.memory_space<vmem>>, vector<1x2x4x4x128xf32>
    %192 = vector.shape_cast %191 : vector<1x2x4x4x128xf32> to vector<2x4x4x128xf32>
    %193 = vector.shape_cast %190 : vector<128xf32> to vector<1x1x1x128xf32>
    %194 = vector.broadcast %193 : vector<1x1x1x128xf32> to vector<2x4x4x128xf32>
    %195 = arith.mulf %192, %194 : vector<2x4x4x128xf32>
    %196 = arith.addf %188, %195 : vector<2x4x4x128xf32>
    %c16 = arith.constant 16 : index
    %c0_199 = arith.constant 0 : index
    %197 = vector.load %arg2[%c16, %c0_199] : memref<27x128xf32, #tpu.memory_space<vmem>>, vector<1x128xf32>
    %198 = vector.shape_cast %197 : vector<1x128xf32> to vector<128xf32>
    %c1_200 = arith.constant 1 : index
    %c1_201 = arith.constant 1 : index
    %c2_202 = arith.constant 2 : index
    %c0_203 = arith.constant 0 : index
    %c0_204 = arith.constant 0 : index
    %199 = vector.load %arg5[%c1_200, %c1_201, %c2_202, %c0_203, %c0_204] : memref<3x4x6x4x128xf32, #tpu.memory_space<vmem>>, vector<1x2x4x4x128xf32>
    %200 = vector.shape_cast %199 : vector<1x2x4x4x128xf32> to vector<2x4x4x128xf32>
    %201 = vector.shape_cast %198 : vector<128xf32> to vector<1x1x1x128xf32>
    %202 = vector.broadcast %201 : vector<1x1x1x128xf32> to vector<2x4x4x128xf32>
    %203 = arith.mulf %200, %202 : vector<2x4x4x128xf32>
    %204 = arith.addf %196, %203 : vector<2x4x4x128xf32>
    %c17 = arith.constant 17 : index
    %c0_205 = arith.constant 0 : index
    %205 = vector.load %arg2[%c17, %c0_205] : memref<27x128xf32, #tpu.memory_space<vmem>>, vector<1x128xf32>
    %206 = vector.shape_cast %205 : vector<1x128xf32> to vector<128xf32>
    %c2_206 = arith.constant 2 : index
    %c1_207 = arith.constant 1 : index
    %c2_208 = arith.constant 2 : index
    %c0_209 = arith.constant 0 : index
    %c0_210 = arith.constant 0 : index
    %207 = vector.load %arg5[%c2_206, %c1_207, %c2_208, %c0_209, %c0_210] : memref<3x4x6x4x128xf32, #tpu.memory_space<vmem>>, vector<1x2x4x4x128xf32>
    %208 = vector.shape_cast %207 : vector<1x2x4x4x128xf32> to vector<2x4x4x128xf32>
    %209 = vector.shape_cast %206 : vector<128xf32> to vector<1x1x1x128xf32>
    %210 = vector.broadcast %209 : vector<1x1x1x128xf32> to vector<2x4x4x128xf32>
    %211 = arith.mulf %208, %210 : vector<2x4x4x128xf32>
    %212 = arith.addf %204, %211 : vector<2x4x4x128xf32>
    %c18 = arith.constant 18 : index
    %c0_211 = arith.constant 0 : index
    %213 = vector.load %arg2[%c18, %c0_211] : memref<27x128xf32, #tpu.memory_space<vmem>>, vector<1x128xf32>
    %214 = vector.shape_cast %213 : vector<1x128xf32> to vector<128xf32>
    %c0_212 = arith.constant 0 : index
    %c2_213 = arith.constant 2 : index
    %c0_214 = arith.constant 0 : index
    %c0_215 = arith.constant 0 : index
    %c0_216 = arith.constant 0 : index
    %215 = vector.load %arg5[%c0_212, %c2_213, %c0_214, %c0_215, %c0_216] : memref<3x4x6x4x128xf32, #tpu.memory_space<vmem>>, vector<1x2x4x4x128xf32>
    %216 = vector.shape_cast %215 : vector<1x2x4x4x128xf32> to vector<2x4x4x128xf32>
    %217 = vector.shape_cast %214 : vector<128xf32> to vector<1x1x1x128xf32>
    %218 = vector.broadcast %217 : vector<1x1x1x128xf32> to vector<2x4x4x128xf32>
    %219 = arith.mulf %216, %218 : vector<2x4x4x128xf32>
    %220 = arith.addf %212, %219 : vector<2x4x4x128xf32>
    %c19 = arith.constant 19 : index
    %c0_217 = arith.constant 0 : index
    %221 = vector.load %arg2[%c19, %c0_217] : memref<27x128xf32, #tpu.memory_space<vmem>>, vector<1x128xf32>
    %222 = vector.shape_cast %221 : vector<1x128xf32> to vector<128xf32>
    %c1_218 = arith.constant 1 : index
    %c2_219 = arith.constant 2 : index
    %c0_220 = arith.constant 0 : index
    %c0_221 = arith.constant 0 : index
    %c0_222 = arith.constant 0 : index
    %223 = vector.load %arg5[%c1_218, %c2_219, %c0_220, %c0_221, %c0_222] : memref<3x4x6x4x128xf32, #tpu.memory_space<vmem>>, vector<1x2x4x4x128xf32>
    %224 = vector.shape_cast %223 : vector<1x2x4x4x128xf32> to vector<2x4x4x128xf32>
    %225 = vector.shape_cast %222 : vector<128xf32> to vector<1x1x1x128xf32>
    %226 = vector.broadcast %225 : vector<1x1x1x128xf32> to vector<2x4x4x128xf32>
    %227 = arith.mulf %224, %226 : vector<2x4x4x128xf32>
    %228 = arith.addf %220, %227 : vector<2x4x4x128xf32>
    %c20 = arith.constant 20 : index
    %c0_223 = arith.constant 0 : index
    %229 = vector.load %arg2[%c20, %c0_223] : memref<27x128xf32, #tpu.memory_space<vmem>>, vector<1x128xf32>
    %230 = vector.shape_cast %229 : vector<1x128xf32> to vector<128xf32>
    %c2_224 = arith.constant 2 : index
    %c2_225 = arith.constant 2 : index
    %c0_226 = arith.constant 0 : index
    %c0_227 = arith.constant 0 : index
    %c0_228 = arith.constant 0 : index
    %231 = vector.load %arg5[%c2_224, %c2_225, %c0_226, %c0_227, %c0_228] : memref<3x4x6x4x128xf32, #tpu.memory_space<vmem>>, vector<1x2x4x4x128xf32>
    %232 = vector.shape_cast %231 : vector<1x2x4x4x128xf32> to vector<2x4x4x128xf32>
    %233 = vector.shape_cast %230 : vector<128xf32> to vector<1x1x1x128xf32>
    %234 = vector.broadcast %233 : vector<1x1x1x128xf32> to vector<2x4x4x128xf32>
    %235 = arith.mulf %232, %234 : vector<2x4x4x128xf32>
    %236 = arith.addf %228, %235 : vector<2x4x4x128xf32>
    %c21 = arith.constant 21 : index
    %c0_229 = arith.constant 0 : index
    %237 = vector.load %arg2[%c21, %c0_229] : memref<27x128xf32, #tpu.memory_space<vmem>>, vector<1x128xf32>
    %238 = vector.shape_cast %237 : vector<1x128xf32> to vector<128xf32>
    %c0_230 = arith.constant 0 : index
    %c2_231 = arith.constant 2 : index
    %c1_232 = arith.constant 1 : index
    %c0_233 = arith.constant 0 : index
    %c0_234 = arith.constant 0 : index
    %239 = vector.load %arg5[%c0_230, %c2_231, %c1_232, %c0_233, %c0_234] : memref<3x4x6x4x128xf32, #tpu.memory_space<vmem>>, vector<1x2x4x4x128xf32>
    %240 = vector.shape_cast %239 : vector<1x2x4x4x128xf32> to vector<2x4x4x128xf32>
    %241 = vector.shape_cast %238 : vector<128xf32> to vector<1x1x1x128xf32>
    %242 = vector.broadcast %241 : vector<1x1x1x128xf32> to vector<2x4x4x128xf32>
    %243 = arith.mulf %240, %242 : vector<2x4x4x128xf32>
    %244 = arith.addf %236, %243 : vector<2x4x4x128xf32>
    %c22 = arith.constant 22 : index
    %c0_235 = arith.constant 0 : index
    %245 = vector.load %arg2[%c22, %c0_235] : memref<27x128xf32, #tpu.memory_space<vmem>>, vector<1x128xf32>
    %246 = vector.shape_cast %245 : vector<1x128xf32> to vector<128xf32>
    %c1_236 = arith.constant 1 : index
    %c2_237 = arith.constant 2 : index
    %c1_238 = arith.constant 1 : index
    %c0_239 = arith.constant 0 : index
    %c0_240 = arith.constant 0 : index
    %247 = vector.load %arg5[%c1_236, %c2_237, %c1_238, %c0_239, %c0_240] : memref<3x4x6x4x128xf32, #tpu.memory_space<vmem>>, vector<1x2x4x4x128xf32>
    %248 = vector.shape_cast %247 : vector<1x2x4x4x128xf32> to vector<2x4x4x128xf32>
    %249 = vector.shape_cast %246 : vector<128xf32> to vector<1x1x1x128xf32>
    %250 = vector.broadcast %249 : vector<1x1x1x128xf32> to vector<2x4x4x128xf32>
    %251 = arith.mulf %248, %250 : vector<2x4x4x128xf32>
    %252 = arith.addf %244, %251 : vector<2x4x4x128xf32>
    %c23 = arith.constant 23 : index
    %c0_241 = arith.constant 0 : index
    %253 = vector.load %arg2[%c23, %c0_241] : memref<27x128xf32, #tpu.memory_space<vmem>>, vector<1x128xf32>
    %254 = vector.shape_cast %253 : vector<1x128xf32> to vector<128xf32>
    %c2_242 = arith.constant 2 : index
    %c2_243 = arith.constant 2 : index
    %c1_244 = arith.constant 1 : index
    %c0_245 = arith.constant 0 : index
    %c0_246 = arith.constant 0 : index
    %255 = vector.load %arg5[%c2_242, %c2_243, %c1_244, %c0_245, %c0_246] : memref<3x4x6x4x128xf32, #tpu.memory_space<vmem>>, vector<1x2x4x4x128xf32>
    %256 = vector.shape_cast %255 : vector<1x2x4x4x128xf32> to vector<2x4x4x128xf32>
    %257 = vector.shape_cast %254 : vector<128xf32> to vector<1x1x1x128xf32>
    %258 = vector.broadcast %257 : vector<1x1x1x128xf32> to vector<2x4x4x128xf32>
    %259 = arith.mulf %256, %258 : vector<2x4x4x128xf32>
    %260 = arith.addf %252, %259 : vector<2x4x4x128xf32>
    %c24 = arith.constant 24 : index
    %c0_247 = arith.constant 0 : index
    %261 = vector.load %arg2[%c24, %c0_247] : memref<27x128xf32, #tpu.memory_space<vmem>>, vector<1x128xf32>
    %262 = vector.shape_cast %261 : vector<1x128xf32> to vector<128xf32>
    %c0_248 = arith.constant 0 : index
    %c2_249 = arith.constant 2 : index
    %c2_250 = arith.constant 2 : index
    %c0_251 = arith.constant 0 : index
    %c0_252 = arith.constant 0 : index
    %263 = vector.load %arg5[%c0_248, %c2_249, %c2_250, %c0_251, %c0_252] : memref<3x4x6x4x128xf32, #tpu.memory_space<vmem>>, vector<1x2x4x4x128xf32>
    %264 = vector.shape_cast %263 : vector<1x2x4x4x128xf32> to vector<2x4x4x128xf32>
    %265 = vector.shape_cast %262 : vector<128xf32> to vector<1x1x1x128xf32>
    %266 = vector.broadcast %265 : vector<1x1x1x128xf32> to vector<2x4x4x128xf32>
    %267 = arith.mulf %264, %266 : vector<2x4x4x128xf32>
    %268 = arith.addf %260, %267 : vector<2x4x4x128xf32>
    %c25 = arith.constant 25 : index
    %c0_253 = arith.constant 0 : index
    %269 = vector.load %arg2[%c25, %c0_253] : memref<27x128xf32, #tpu.memory_space<vmem>>, vector<1x128xf32>
    %270 = vector.shape_cast %269 : vector<1x128xf32> to vector<128xf32>
    %c1_254 = arith.constant 1 : index
    %c2_255 = arith.constant 2 : index
    %c2_256 = arith.constant 2 : index
    %c0_257 = arith.constant 0 : index
    %c0_258 = arith.constant 0 : index
    %271 = vector.load %arg5[%c1_254, %c2_255, %c2_256, %c0_257, %c0_258] : memref<3x4x6x4x128xf32, #tpu.memory_space<vmem>>, vector<1x2x4x4x128xf32>
    %272 = vector.shape_cast %271 : vector<1x2x4x4x128xf32> to vector<2x4x4x128xf32>
    %273 = vector.shape_cast %270 : vector<128xf32> to vector<1x1x1x128xf32>
    %274 = vector.broadcast %273 : vector<1x1x1x128xf32> to vector<2x4x4x128xf32>
    %275 = arith.mulf %272, %274 : vector<2x4x4x128xf32>
    %276 = arith.addf %268, %275 : vector<2x4x4x128xf32>
    %c26 = arith.constant 26 : index
    %c0_259 = arith.constant 0 : index
    %277 = vector.load %arg2[%c26, %c0_259] : memref<27x128xf32, #tpu.memory_space<vmem>>, vector<1x128xf32>
    %278 = vector.shape_cast %277 : vector<1x128xf32> to vector<128xf32>
    %c2_260 = arith.constant 2 : index
    %c2_261 = arith.constant 2 : index
    %c2_262 = arith.constant 2 : index
    %c0_263 = arith.constant 0 : index
    %c0_264 = arith.constant 0 : index
    %279 = vector.load %arg5[%c2_260, %c2_261, %c2_262, %c0_263, %c0_264] : memref<3x4x6x4x128xf32, #tpu.memory_space<vmem>>, vector<1x2x4x4x128xf32>
    %280 = vector.shape_cast %279 : vector<1x2x4x4x128xf32> to vector<2x4x4x128xf32>
    %281 = vector.shape_cast %278 : vector<128xf32> to vector<1x1x1x128xf32>
    %282 = vector.broadcast %281 : vector<1x1x1x128xf32> to vector<2x4x4x128xf32>
    %283 = arith.mulf %280, %282 : vector<2x4x4x128xf32>
    %284 = arith.addf %276, %283 : vector<2x4x4x128xf32>
    %c0_265 = arith.constant 0 : index
    %c0_266 = arith.constant 0 : index
    %285 = vector.load %arg3[%c0_265, %c0_266] : memref<1x128xf32, #tpu.memory_space<vmem>>, vector<1x128xf32>
    %286 = vector.shape_cast %285 : vector<1x128xf32> to vector<128xf32>
    %287 = vector.shape_cast %286 : vector<128xf32> to vector<1x1x1x128xf32>
    %288 = vector.broadcast %287 : vector<1x1x1x128xf32> to vector<2x4x4x128xf32>
    %289 = arith.addf %284, %288 : vector<2x4x4x128xf32>
    %c0_267 = arith.constant 0 : index
    %c0_268 = arith.constant 0 : index
    %c0_269 = arith.constant 0 : index
    %c0_270 = arith.constant 0 : index
    %c0_271 = arith.constant 0 : index
    %290 = vector.load %arg4[%c0_267, %c0_268, %c0_269, %c0_270, %c0_271] : memref<1x2x4x4x128xf32, #tpu.memory_space<vmem>>, vector<1x2x4x4x128xf32>
    %291 = vector.shape_cast %290 : vector<1x2x4x4x128xf32> to vector<2x4x4x128xf32>
    %292 = vector.shape_cast %289 : vector<2x4x4x128xf32> to vector<1x2x4x4x128xf32>
    tpu.vector_store %arg4[%c0_267, %c0_268, %c0_269, %c0_270, %c0_271], %292 {strides = array<i32>} : memref<1x2x4x4x128xf32, #tpu.memory_space<vmem>>, vector<1x2x4x4x128xf32>,
    return
  }
  func.func @transform_0(%arg0: i32) -> (i32, i32, i32, i32, i32) {
    %c0_i32 = arith.constant 0 : i32
    %c0_i32_0 = arith.constant 0 : i32
    %c0_i32_1 = arith.constant 0 : i32
    %c0_i32_2 = arith.constant 0 : i32
    %c0_i32_3 = arith.constant 0 : i32
    return %arg0, %c0_i32, %c0_i32_0, %c0_i32_1, %c0_i32_2 : i32, i32, i32, i32, i32
  }
  func.func @transform_1(%arg0: i32) -> (i32, i32) {
    %c0_i32 = arith.constant 0 : i32
    %c0_i32_0 = arith.constant 0 : i32
    %c0_i32_1 = arith.constant 0 : i32
    return %c0_i32, %c0_i32_0 : i32, i32
  }
  func.func @transform_2(%arg0: i32) -> (i32, i32) {
    %c0_i32 = arith.constant 0 : i32
    %c0_i32_0 = arith.constant 0 : i32
    %c0_i32_1 = arith.constant 0 : i32
    return %c0_i32, %c0_i32_0 : i32, i32
  }
  func.func @transform_3(%arg0: i32) -> (i32, i32, i32, i32, i32) {
    %c0_i32 = arith.constant 0 : i32
    %c0_i32_0 = arith.constant 0 : i32
    %c0_i32_1 = arith.constant 0 : i32
    %c0_i32_2 = arith.constant 0 : i32
    %c0_i32_3 = arith.constant 0 : i32
    return %arg0, %c0_i32, %c0_i32_0, %c0_i32_1, %c0_i32_2 : i32, i32, i32, i32, i32
  }
}

</mosaic_0001>

<llo_original>
// kernel: tpu_custom_call.1
$region0: #{tpu_custom_call.1}
  #allocation0 [shape = 'u32[]', space=smem, size = 0x4, offset = 0x4, fixed_abs, tag = 'smem constant byte address 0x4 - core index']
  #allocation1 [shape = 'u32[144,128]{1,0:T(1,128)}', space=vmem, size = 0x12000, scoped, tag = 'internal scratch']
  #allocation2 [shape = 'f32[3,4,6,4,128]{4,3,2,1,0:T(4,128)}', space=vmem, size = 0x24000, scoped, tag = 'scratch operand']
  %s0 = inlined_call_operand.hbm [shape: f32[2,2,4,4,128], index: 0, kind: input, shape index: {}]
  %s1 = inlined_call_operand.hbm [shape: f32[27,128], index: 1, kind: input, shape index: {}]
  %s2 = inlined_call_operand.vmem [shape: f32[1,128], index: 2, kind: input, shape index: {}]
  %s3 = inlined_call_operand.hbm [shape: f32[2,2,4,4,128], index: 3, kind: output, shape index: {}]
  %s4 = sld [smem:[#allocation0]]
  $region53: #{tpu_custom_call.1} parent=0
    _
  %s6 = ssub.s32 1, %s4
  %s7 = scalar_select 0, %s6, %s4
  $region1: #{tpu_custom_call.1} parent=0
    #allocation3 [shape = 'u8[32768]{0}', space=vmem, size = 0x8000, scoped, tag = 'input window, operand 0']
    #allocation4 [shape = 's32[2]{0}', space=sflag, size = 0x8, scoped, tag = 'scoped memory for tpu_custom_call.1']
    #allocation5 [shape = 's32[2]{0}', space=sflag, size = 0x8, scoped, tag = 'scoped memory for tpu_custom_call.1']
    #allocation6 [shape = 'u8[16384]{0}', space=vmem, size = 0x4000, scoped, tag = 'input window, operand 1, single buffered']
    #allocation7 [shape = 's32[1]{0}', space=sflag, size = 0x4, scoped, tag = 'scoped memory for tpu_custom_call.1']
    #allocation8 [shape = 'u8[32768]{0}', space=vmem, size = 0x8000, scoped, tag = 'output window, operand 0']
    %8 = vsyncpa [#allocation4], 0
    %s9 = scalar_lea.sflag [#allocation4], 1
    %10 = vsyncpa %s9, 0
    %11 = vsyncpa [#allocation7], 0
    %12 = vsyncpa [#allocation5], 0
    %s13 = scalar_lea.sflag [#allocation5], 1
    %14 = vsyncpa %s13, 0
    loop: start=0, step=1, limit=4
    $region2: #{tpu_custom_call.1} parent=1 // loop_pre_header
      _
    $region3: #{tpu_custom_call.1} parent=1 // loop_header
      %s16 = sphi 0, %s20
      %p17 = scmp.ge.s32.totalorder %s16, 4
      %s26 = sphi 0, %s28
      %s29 = sphi 0, %s26
      %s30 = sphi 0, %s29
      %s46 = sphi 0, %s30
      %s50 = sphi 0, %s50
      %s52 = sphi 0, %s50
      %s53 = sphi 0, %s52
      %s67 = sphi 0, %s53
      %s71 = sphi 0, %s71
      %s73 = sphi 0, %s71
      %s74 = sphi 0, %s73
      %s88 = sphi 0, %s74
      %s94 = sphi 0, %s96
      %s97 = sphi 0, %s94
      %s98 = sphi 0, %s97
      %s114 = sphi 0, %s98
    $region4: #{tpu_custom_call.1} parent=1 // loop_header_branch
      %19 = sbr.rel (%p17) target = $region8
    $region5: #{tpu_custom_call.1} parent=1 // loop_body
      %s21 = ssub.s32 %s16, 1
      %s22 = ssub.s32 %s16, 2
      %s23 = sadd.s32 %s16, 1
      %s24 = ssub.s32 %s16, %s23
      %p25 = scmp.eq.s32.totalorder %s24, 0
      %s27 = sadd.s32 %s26, 1
      %s28 = scalar_select %p25, %s26, %s27
      %p31 = pneg %p25
      %p32 = scmp.eq.s32.totalorder %s16, 1
      %p33 = por %p31, %p32
      %p34 = scmp.ne.s32.totalorder %s26, %s29
      %p35 = scmp.eq.s32.totalorder %s16, 0
      %p36 = por %p34, %p35
      %p37 = scmp.ne.s32.totalorder %s26, %s29
      %p38 = scmp.eq.s32.totalorder %s21, 1
      %p39 = por %p37, %p38
      %p40 = scmp.ne.s32.totalorder %s29, %s30
      %p41 = scmp.eq.s32.totalorder %s21, 0
      %p42 = por %p40, %p41
      %p43 = scmp.ne.s32.totalorder %s29, %s30
      %p44 = scmp.eq.s32.totalorder %s22, 1
      %p45 = por %p43, %p44
      %p47 = scmp.ne.s32.totalorder %s30, %s46
      %p48 = scmp.eq.s32.totalorder %s22, 0
      %p49 = por %p47, %p48
      %s51 = sadd.s32 %s50, 1
      %p54 = scmp.eq.s32.totalorder %s16, 1
      %p55 = scmp.ne.s32.totalorder %s50, %s52
      %p56 = scmp.eq.s32.totalorder %s16, 0
      %p57 = por %p55, %p56
      %p58 = scmp.ne.s32.totalorder %s50, %s52
      %p59 = scmp.eq.s32.totalorder %s21, 1
      %p60 = por %p58, %p59
      %p61 = scmp.ne.s32.totalorder %s52, %s53
      %p62 = scmp.eq.s32.totalorder %s21, 0
      %p63 = por %p61, %p62
      %p64 = scmp.ne.s32.totalorder %s52, %s53
      %p65 = scmp.eq.s32.totalorder %s22, 1
      %p66 = por %p64, %p65
      %p68 = scmp.ne.s32.totalorder %s53, %s67
      %p69 = scmp.eq.s32.totalorder %s22, 0
      %p70 = por %p68, %p69
      %s72 = sadd.s32 %s71, 1
      %p75 = scmp.eq.s32.totalorder %s16, 1
      %p76 = scmp.ne.s32.totalorder %s71, %s73
      %p77 = scmp.eq.s32.totalorder %s16, 0
      %p78 = por %p76, %p77
      %p79 = scmp.ne.s32.totalorder %s71, %s73
      %p80 = scmp.eq.s32.totalorder %s21, 1
      %p81 = por %p79, %p80
      %p82 = scmp.ne.s32.totalorder %s73, %s74
      %p83 = scmp.eq.s32.totalorder %s21, 0
      %p84 = por %p82, %p83
      %p85 = scmp.ne.s32.totalorder %s73, %s74
      %p86 = scmp.eq.s32.totalorder %s22, 1
      %p87 = por %p85, %p86
      %p89 = scmp.ne.s32.totalorder %s74, %s88
      %p90 = scmp.eq.s32.totalorder %s22, 0
      %p91 = por %p89, %p90
      %s92 = ssub.s32 %s16, %s23
      %p93 = scmp.eq.s32.totalorder %s92, 0
      %s95 = sadd.s32 %s94, 1
      %s96 = scalar_select %p93, %s94, %s95
      %p99 = pneg %p93
      %p100 = scmp.eq.s32.totalorder %s16, 1
      %p101 = por %p99, %p100
      %p102 = scmp.ne.s32.totalorder %s94, %s97
      %p103 = scmp.eq.s32.totalorder %s16, 0
      %p104 = por %p102, %p103
      %p105 = scmp.ne.s32.totalorder %s94, %s97
      %p106 = scmp.eq.s32.totalorder %s21, 1
      %p107 = por %p105, %p106
      %p108 = scmp.ne.s32.totalorder %s97, %s98
      %p109 = scmp.eq.s32.totalorder %s21, 0
      %p110 = por %p108, %p109
      %p111 = scmp.ne.s32.totalorder %s97, %s98
      %p112 = scmp.eq.s32.totalorder %s22, 1
      %p113 = por %p111, %p112
      %p115 = scmp.ne.s32.totalorder %s98, %s114
      %p116 = scmp.eq.s32.totalorder %s22, 0
      %p117 = por %p115, %p116
      %p118 = scmp.le.s32.totalorder 1, %s16
      %p119 = scmp.lt.s32.totalorder %s16, 3
      %p120 = pnand %p118, %p119
      %p121 = pneg %p120
      // Predicated region
      $region9: #{tpu_custom_call.1} parent=5 // pred_check
        _
      $region10: #{tpu_custom_call.1} parent=5 // pred_check_branch
        %123 = sbr.rel (%p120) target = $region12
      $region11: #{tpu_custom_call.1} parent=5 // pred_region
        %s124 = ssub.s32 %s16, 1
        // Predicated region
        $region13: #{tpu_custom_call.1} parent=11 // pred_check
          %p125 = pneg %p63
        $region14: #{tpu_custom_call.1} parent=11 // pred_check_branch
          %127 = sbr.rel (%p125) target = $region16
        $region15: #{tpu_custom_call.1} parent=11 // pred_region
          %s129 = ssub.s32 512, 512
          %130 = vsyncadd [#allocation7], %s129
          %s131 = sshll.u32 [#allocation6], 4
          %s132 = int_to_ptr.vmem [resolvable:$true] %s131
          %137 = dma.hbm_to_vmem [thread:$0]  %s1, 512, %s132, [#allocation7], 128, 128, 8
        $region16: #{tpu_custom_call.1} parent=11 // pred_fallthru
          _
        // Predicated region
        $region17: #{tpu_custom_call.1} parent=11 // pred_check
          %p138 = pneg %p84
        $region18: #{tpu_custom_call.1} parent=11 // pred_check_branch
          %140 = sbr.rel (%p138) target = $region20
        $region19: #{tpu_custom_call.1} parent=11 // pred_region
          _
        $region20: #{tpu_custom_call.1} parent=11 // pred_fallthru
          _
      $region12: #{tpu_custom_call.1} parent=5 // pred_fallthru
        _
      %p141 = scmp.lt.s32.totalorder %s16, 2
      // Predicated region
      $region21: #{tpu_custom_call.1} parent=5 // pred_check
        %p142 = pneg %p141
      $region22: #{tpu_custom_call.1} parent=5 // pred_check_branch
        %144 = sbr.rel (%p142) target = $region24
      $region23: #{tpu_custom_call.1} parent=5 // pred_region
        // Predicated region
        $region25: #{tpu_custom_call.1} parent=23 // pred_check
          %p145 = pneg %p36
        $region26: #{tpu_custom_call.1} parent=23 // pred_check_branch
          %147 = sbr.rel (%p145) target = $region28
        $region27: #{tpu_custom_call.1} parent=23 // pred_region
          %s148 = sand.u32 %s26, 1
          %s149 = scalar_lea.sflag [#allocation4], %s148
          %s150 = sand.u32 %s26, 1
          %s151 = smul.addr %s150, 32
          %s152 = scalar_lea.vmem [#allocation3], %s151
          %s154 = ssub.s32 512, 512
          %155 = vsyncadd %s149, %s154
          %s156 = smul.addr %s16, 8
          %s157 = smul.addr %s156, 64
          %s158 = scalar_lea.hbm %s0, %s157
          %s159 = sshll.u32 %s152, 4
          %s160 = int_to_ptr.vmem [resolvable:$true] %s159
          %165 = dma.hbm_to_vmem [thread:$0]  %s158, 512, %s160, %s149, 64, 64, 4
        $region28: #{tpu_custom_call.1} parent=23 // pred_fallthru
          _
      $region24: #{tpu_custom_call.1} parent=5 // pred_fallthru
        _
      %p166 = scmp.le.s32.totalorder 1, %s16
      %p167 = scmp.lt.s32.totalorder %s16, 3
      %p168 = pnand %p166, %p167
      %p169 = pneg %p168
      // Predicated region
      $region29: #{tpu_custom_call.1} parent=5 // pred_check
        _
      $region30: #{tpu_custom_call.1} parent=5 // pred_check_branch
        %171 = sbr.rel (%p168) target = $region32
      $region31: #{tpu_custom_call.1} parent=5 // pred_region
        %s172 = ssub.s32 %s16, 1
        %s173 = sand.u32 %s29, 1
        %s174 = scalar_lea.sflag [#allocation4], %s173
        %s175 = sand.u32 %s29, 1
        %s176 = smul.addr %s175, 32
        %s177 = scalar_lea.vmem [#allocation3], %s176
        // Predicated region
        $region33: #{tpu_custom_call.1} parent=31 // pred_check
          %p178 = pneg %p42
        $region34: #{tpu_custom_call.1} parent=31 // pred_check_branch
          %180 = sbr.rel (%p178) target = $region36
        $region35: #{tpu_custom_call.1} parent=31 // pred_region
          %181 = dma.done %s174, 512
        $region36: #{tpu_custom_call.1} parent=31 // pred_fallthru
          _
        // Predicated region
        $region37: #{tpu_custom_call.1} parent=31 // pred_check
          %p182 = pneg %p63
        $region38: #{tpu_custom_call.1} parent=31 // pred_check_branch
          %184 = sbr.rel (%p182) target = $region40
        $region39: #{tpu_custom_call.1} parent=31 // pred_region
          %185 = dma.done [#allocation7], 512
        $region40: #{tpu_custom_call.1} parent=31 // pred_fallthru
          _
        %s186 = sand.u32 %s29, 1
        %s187 = scalar_lea.sflag [#allocation4], %s186
        %s188 = sand.u32 %s29, 1
        %s189 = smul.addr %s188, 32
        %s190 = scalar_lea.vmem [#allocation3], %s189
        %p191 = pneg %p42
        %p192 = pneg %p39
        %p193 = pneg %p63
        %p194 = pneg %p60
        %p195 = pneg %p84
        %p196 = pneg %p81
        %p197 = pneg %p110
        %p198 = pneg %p107
        %s199 = sand.u32 %s97, 1
        %s200 = scalar_lea.sflag [#allocation5], %s199
        %s201 = sand.u32 %s97, 1
        %s202 = smul.addr %s201, 32
        %s203 = scalar_lea.vmem [#allocation8], %s202
        %v204 = vld [vmem:[%s177] sm:$0xf]
        %v205 = vld [vmem:[%s177 + $0x4] sm:$0xf]
        %v206 = vld [vmem:[%s177 + $0x8] sm:$0xf]
        %v207 = vld [vmem:[%s177 + $0xc] sm:$0xf]
        %v208 = vld [vmem:[%s177 + $0x10] sm:$0xf]
        %v209 = vld [vmem:[%s177 + $0x14] sm:$0xf]
        %v210 = vld [vmem:[%s177 + $0x18] sm:$0xf]
        %v211 = vld [vmem:[%s177 + $0x1c] sm:$0xf]
        %212 = vst [vmem:[#allocation2] sm:$0xf] 0.0
        %213 = vst [vmem:[#allocation2 + $0x4] sm:$0xf] 0.0
        %214 = vst [vmem:[#allocation2 + $0x8] sm:$0xf] 0.0
        %215 = vst [vmem:[#allocation2 + $0xc] sm:$0xf] 0.0
        %216 = vst [vmem:[#allocation2 + $0x10] sm:$0xf] 0.0
        %217 = vst [vmem:[#allocation2 + $0x14] sm:$0xf] 0.0
        %s218 = scalar_lea.vmem [#allocation2], 72
        %219 = vst [vmem:[%s218] sm:$0xf] 0.0
        %220 = vst [vmem:[%s218 + $0x4] sm:$0xf] 0.0
        %221 = vst [vmem:[%s218 + $0x8] sm:$0xf] 0.0
        %222 = vst [vmem:[%s218 + $0xc] sm:$0xf] 0.0
        %223 = vst [vmem:[%s218 + $0x10] sm:$0xf] 0.0
        %224 = vst [vmem:[%s218 + $0x14] sm:$0xf] 0.0
        %s225 = scalar_lea.vmem [#allocation2], 24
        %226 = vst [vmem:[%s225] sm:$0xf] 0.0
        %227 = vst [vmem:[%s225 + $0x18] sm:$0xf] 0.0
        %s228 = scalar_lea.vmem [#allocation2], 44
        %229 = vst [vmem:[%s228] sm:$0xf] 0.0
        %230 = vst [vmem:[%s228 + $0x18] sm:$0xf] 0.0
        %s231 = scalar_lea.vmem [#allocation2], 96
        %232 = vst [vmem:[%s231] sm:$0xf] 0.0
        %233 = vst [vmem:[%s231 + $0x4] sm:$0xf] 0.0
        %234 = vst [vmem:[%s231 + $0x8] sm:$0xf] 0.0
        %235 = vst [vmem:[%s231 + $0xc] sm:$0xf] 0.0
        %236 = vst [vmem:[%s231 + $0x10] sm:$0xf] 0.0
        %237 = vst [vmem:[%s231 + $0x14] sm:$0xf] 0.0
        %s238 = scalar_lea.vmem [#allocation2], 168
        %239 = vst [vmem:[%s238] sm:$0xf] 0.0
        %240 = vst [vmem:[%s238 + $0x4] sm:$0xf] 0.0
        %241 = vst [vmem:[%s238 + $0x8] sm:$0xf] 0.0
        %242 = vst [vmem:[%s238 + $0xc] sm:$0xf] 0.0
        %243 = vst [vmem:[%s238 + $0x10] sm:$0xf] 0.0
        %244 = vst [vmem:[%s238 + $0x14] sm:$0xf] 0.0
        %s245 = scalar_lea.vmem [#allocation2], 120
        %246 = vst [vmem:[%s245] sm:$0xf] 0.0
        %247 = vst [vmem:[%s245 + $0x18] sm:$0xf] 0.0
        %s248 = scalar_lea.vmem [#allocation2], 140
        %249 = vst [vmem:[%s248] sm:$0xf] 0.0
        %250 = vst [vmem:[%s248 + $0x18] sm:$0xf] 0.0
        %s251 = scalar_lea.vmem [#allocation2], 192
        %252 = vst [vmem:[%s251] sm:$0xf] 0.0
        %253 = vst [vmem:[%s251 + $0x4] sm:$0xf] 0.0
        %254 = vst [vmem:[%s251 + $0x8] sm:$0xf] 0.0
        %255 = vst [vmem:[%s251 + $0xc] sm:$0xf] 0.0
        %256 = vst [vmem:[%s251 + $0x10] sm:$0xf] 0.0
        %257 = vst [vmem:[%s251 + $0x14] sm:$0xf] 0.0
        %s258 = scalar_lea.vmem [#allocation2], 264
        %259 = vst [vmem:[%s258] sm:$0xf] 0.0
        %260 = vst [vmem:[%s258 + $0x4] sm:$0xf] 0.0
        %261 = vst [vmem:[%s258 + $0x8] sm:$0xf] 0.0
        %262 = vst [vmem:[%s258 + $0xc] sm:$0xf] 0.0
        %263 = vst [vmem:[%s258 + $0x10] sm:$0xf] 0.0
        %264 = vst [vmem:[%s258 + $0x14] sm:$0xf] 0.0
        %s265 = scalar_lea.vmem [#allocation2], 216
        %266 = vst [vmem:[%s265] sm:$0xf] 0.0
        %267 = vst [vmem:[%s265 + $0x18] sm:$0xf] 0.0
        %s268 = scalar_lea.vmem [#allocation2], 236
        %269 = vst [vmem:[%s268] sm:$0xf] 0.0
        %270 = vst [vmem:[%s268 + $0x18] sm:$0xf] 0.0
        %s271 = scalar_lea.vmem [#allocation2], 124
        %272 = vst [vmem:[%s271] sm:$0xf] %v204
        %273 = vst [vmem:[%s271 + $0x4] sm:$0xf] %v205
        %274 = vst [vmem:[%s271 + $0x8] sm:$0xf] %v206
        %275 = vst [vmem:[%s271 + $0xc] sm:$0xf] %v207
        %276 = vst [vmem:[%s271 + $0x18] sm:$0xf] %v208
        %277 = vst [vmem:[%s271 + $0x1c] sm:$0xf] %v209
        %278 = vst [vmem:[%s271 + $0x20] sm:$0xf] %v210
        %279 = vst [vmem:[%s271 + $0x24] sm:$0xf] %v211
        %s280 = scalar_lea.vmem [#allocation2], 28
        %281 = vst [vmem:[%s280] sm:$0x1] 0.0
        %282 = vst [vmem:[%s280 + $0x4] sm:$0x1] 0.0
        %283 = vst [vmem:[%s280 + $0x8] sm:$0x1] 0.0
        %284 = vst [vmem:[%s280 + $0xc] sm:$0x1] 0.0
        %285 = vst [vmem:[%s280 + $0x18] sm:$0x1] 0.0
        %286 = vst [vmem:[%s280 + $0x1c] sm:$0x1] 0.0
        %287 = vst [vmem:[%s280 + $0x20] sm:$0x1] 0.0
        %288 = vst [vmem:[%s280 + $0x24] sm:$0x1] 0.0
        %289 = vst [vmem:[%s280 + $0x1] sm:$0x7] %v204
        %290 = vst [vmem:[%s280 + $0x5] sm:$0x7] %v205
        %291 = vst [vmem:[%s280 + $0x9] sm:$0x7] %v206
        %292 = vst [vmem:[%s280 + $0xd] sm:$0x7] %v207
        %293 = vst [vmem:[%s280 + $0x19] sm:$0x7] %v208
        %294 = vst [vmem:[%s280 + $0x1d] sm:$0x7] %v209
        %295 = vst [vmem:[%s280 + $0x21] sm:$0x7] %v210
        %296 = vst [vmem:[%s280 + $0x25] sm:$0x7] %v211
        %s297 = scalar_lea.vmem [#allocation2], 220
        %298 = vst [vmem:[%s297 + $0x3] sm:$0x1] 0.0
        %299 = vst [vmem:[%s297 + $0x7] sm:$0x1] 0.0
        %300 = vst [vmem:[%s297 + $0xb] sm:$0x1] 0.0
        %301 = vst [vmem:[%s297 + $0xf] sm:$0x1] 0.0
        %302 = vst [vmem:[%s297 + $0x1b] sm:$0x1] 0.0
        %303 = vst [vmem:[%s297 + $0x1f] sm:$0x1] 0.0
        %304 = vst [vmem:[%s297 + $0x23] sm:$0x1] 0.0
        %305 = vst [vmem:[%s297 + $0x27] sm:$0x1] 0.0
        %306 = vst [vmem:[%s297 - $0x1] sm:$0xe] %v204
        %307 = vst [vmem:[%s297 + $0x3] sm:$0xe] %v205
        %308 = vst [vmem:[%s297 + $0x7] sm:$0xe] %v206
        %309 = vst [vmem:[%s297 + $0xb] sm:$0xe] %v207
        %310 = vst [vmem:[%s297 + $0x17] sm:$0xe] %v208
        %311 = vst [vmem:[%s297 + $0x1b] sm:$0xe] %v209
        %312 = vst [vmem:[%s297 + $0x1f] sm:$0xe] %v210
        %313 = vst [vmem:[%s297 + $0x23] sm:$0xe] %v211
        %v314 = vld [vmem:[#allocation6] sm:$0x1]
        %v315 = vld [vmem:[#allocation2] sm:$0xf]
        %v316 = vld [vmem:[#allocation2 + $0x4] sm:$0xf]
        %v317 = vld [vmem:[#allocation2 + $0x8] sm:$0xf]
        %v318 = vld [vmem:[#allocation2 + $0xc] sm:$0xf]
        %v319 = vld [vmem:[#allocation2 + $0x18] sm:$0xf]
        %v320 = vld [vmem:[#allocation2 + $0x1c] sm:$0xf]
        %v321 = vld [vmem:[#allocation2 + $0x20] sm:$0xf]
        %v322 = vld [vmem:[#allocation2 + $0x24] sm:$0xf]
        %v323 = vlaneseq
        %v324 = vshrl.u32 %v323, 7
        %v325 = vsub.s32 0, %v324
        %v326 = vrot.slane %v314, %v325
        %v327 = vmul.f32 %v315, %v326
        %v328 = vmul.f32 %v316, %v326
        %v329 = vmul.f32 %v317, %v326
        %v330 = vmul.f32 %v318, %v326
        %v331 = vmul.f32 %v319, %v326
        %v332 = vmul.f32 %v320, %v326
        %v333 = vmul.f32 %v321, %v326
        %v334 = vmul.f32 %v322, %v326
        %v335 = vadd.f32 %v327, 0.0
        %v336 = vadd.f32 %v328, 0.0
        %v337 = vadd.f32 %v329, 0.0
        %v338 = vadd.f32 %v330, 0.0
        %v339 = vadd.f32 %v331, 0.0
        %v340 = vadd.f32 %v332, 0.0
        %v341 = vadd.f32 %v333, 0.0
        %v342 = vadd.f32 %v334, 0.0
        %v343 = vld [vmem:[#allocation6 + $0x1] sm:$0x1]
        %v344 = vld [vmem:[%s231] sm:$0xf]
        %v345 = vld [vmem:[%s231 + $0x4] sm:$0xf]
        %v346 = vld [vmem:[%s231 + $0x8] sm:$0xf]
        %v347 = vld [vmem:[%s231 + $0xc] sm:$0xf]
        %v348 = vld [vmem:[%s231 + $0x18] sm:$0xf]
        %v349 = vld [vmem:[%s231 + $0x1c] sm:$0xf]
        %v350 = vld [vmem:[%s231 + $0x20] sm:$0xf]
        %v351 = vld [vmem:[%s231 + $0x24] sm:$0xf]
        %v352 = vlaneseq
        %v353 = vshrl.u32 %v352, 7
        %v354 = vsub.s32 0, %v353
        %v355 = vrot.slane %v343, %v354
        %v356 = vmul.f32 %v344, %v355
        %v357 = vmul.f32 %v345, %v355
        %v358 = vmul.f32 %v346, %v355
        %v359 = vmul.f32 %v347, %v355
        %v360 = vmul.f32 %v348, %v355
        %v361 = vmul.f32 %v349, %v355
        %v362 = vmul.f32 %v350, %v355
        %v363 = vmul.f32 %v351, %v355
        %v364 = vadd.f32 %v335, %v356
        %v365 = vadd.f32 %v336, %v357
        %v366 = vadd.f32 %v337, %v358
        %v367 = vadd.f32 %v338, %v359
        %v368 = vadd.f32 %v339, %v360
        %v369 = vadd.f32 %v340, %v361
        %v370 = vadd.f32 %v341, %v362
        %v371 = vadd.f32 %v342, %v363
        %v372 = vld [vmem:[#allocation6 + $0x2] sm:$0x1]
        %v373 = vld [vmem:[%s251] sm:$0xf]
        %v374 = vld [vmem:[%s251 + $0x4] sm:$0xf]
        %v375 = vld [vmem:[%s251 + $0x8] sm:$0xf]
        %v376 = vld [vmem:[%s251 + $0xc] sm:$0xf]
        %v377 = vld [vmem:[%s251 + $0x18] sm:$0xf]
        %v378 = vld [vmem:[%s251 + $0x1c] sm:$0xf]
        %v379 = vld [vmem:[%s251 + $0x20] sm:$0xf]
        %v380 = vld [vmem:[%s251 + $0x24] sm:$0xf]
        %v381 = vlaneseq
        %v382 = vshrl.u32 %v381, 7
        %v383 = vsub.s32 0, %v382
        %v384 = vrot.slane %v372, %v383
        %v385 = vmul.f32 %v373, %v384
        %v386 = vmul.f32 %v374, %v384
        %v387 = vmul.f32 %v375, %v384
        %v388 = vmul.f32 %v376, %v384
        %v389 = vmul.f32 %v377, %v384
        %v390 = vmul.f32 %v378, %v384
        %v391 = vmul.f32 %v379, %v384
        %v392 = vmul.f32 %v380, %v384
        %v393 = vadd.f32 %v364, %v385
        %v394 = vadd.f32 %v365, %v386
        %v395 = vadd.f32 %v366, %v387
        %v396 = vadd.f32 %v367, %v388
        %v397 = vadd.f32 %v368, %v389
        %v398 = vadd.f32 %v369, %v390
        %v399 = vadd.f32 %v370, %v391
        %v400 = vadd.f32 %v371, %v392
        %v401 = vld [vmem:[#allocation6 + $0x3] sm:$0x1]
        %s402 = scalar_lea.vmem [#allocation2], 4
        %v403 = vld [vmem:[%s402] sm:$0xf]
        %v404 = vld [vmem:[%s402 + $0x4] sm:$0xf]
        %v405 = vld [vmem:[%s402 + $0x8] sm:$0xf]
        %v406 = vld [vmem:[%s402 + $0xc] sm:$0xf]
        %v407 = vld [vmem:[%s402 + $0x18] sm:$0xf]
        %v408 = vld [vmem:[%s402 + $0x1c] sm:$0xf]
        %v409 = vld [vmem:[%s402 + $0x20] sm:$0xf]
        %v410 = vld [vmem:[%s402 + $0x24] sm:$0xf]
        %v411 = vlaneseq
        %v412 = vshrl.u32 %v411, 7
        %v413 = vsub.s32 0, %v412
        %v414 = vrot.slane %v401, %v413
        %v415 = vmul.f32 %v403, %v414
        %v416 = vmul.f32 %v404, %v414
        %v417 = vmul.f32 %v405, %v414
        %v418 = vmul.f32 %v406, %v414
        %v419 = vmul.f32 %v407, %v414
        %v420 = vmul.f32 %v408, %v414
        %v421 = vmul.f32 %v409, %v414
        %v422 = vmul.f32 %v410, %v414
        %v423 = vadd.f32 %v393, %v415
        %v424 = vadd.f32 %v394, %v416
        %v425 = vadd.f32 %v395, %v417
        %v426 = vadd.f32 %v396, %v418
        %v427 = vadd.f32 %v397, %v419
        %v428 = vadd.f32 %v398, %v420
        %v429 = vadd.f32 %v399, %v421
        %v430 = vadd.f32 %v400, %v422
        %v431 = vld [vmem:[#allocation6 + $0x4] sm:$0x1]
        %s432 = scalar_lea.vmem [#allocation2], 100
        %v433 = vld [vmem:[%s432] sm:$0xf]
        %v434 = vld [vmem:[%s432 + $0x4] sm:$0xf]
        %v435 = vld [vmem:[%s432 + $0x8] sm:$0xf]
        %v436 = vld [vmem:[%s432 + $0xc] sm:$0xf]
        %v437 = vld [vmem:[%s432 + $0x18] sm:$0xf]
        %v438 = vld [vmem:[%s432 + $0x1c] sm:$0xf]
        %v439 = vld [vmem:[%s432 + $0x20] sm:$0xf]
        %v440 = vld [vmem:[%s432 + $0x24] sm:$0xf]
        %v441 = vlaneseq
        %v442 = vshrl.u32 %v441, 7
        %v443 = vsub.s32 0, %v442
        %v444 = vrot.slane %v431, %v443
        %v445 = vmul.f32 %v433, %v444
        %v446 = vmul.f32 %v434, %v444
        %v447 = vmul.f32 %v435, %v444
        %v448 = vmul.f32 %v436, %v444
        %v449 = vmul.f32 %v437, %v444
        %v450 = vmul.f32 %v438, %v444
        %v451 = vmul.f32 %v439, %v444
        %v452 = vmul.f32 %v440, %v444
        %v453 = vadd.f32 %v423, %v445
        %v454 = vadd.f32 %v424, %v446
        %v455 = vadd.f32 %v425, %v447
        %v456 = vadd.f32 %v426, %v448
        %v457 = vadd.f32 %v427, %v449
        %v458 = vadd.f32 %v428, %v450
        %v459 = vadd.f32 %v429, %v451
        %v460 = vadd.f32 %v430, %v452
        %v461 = vld [vmem:[#allocation6 + $0x5] sm:$0x1]
        %s462 = scalar_lea.vmem [#allocation2], 196
        %v463 = vld [vmem:[%s462] sm:$0xf]
        %v464 = vld [vmem:[%s462 + $0x4] sm:$0xf]
        %v465 = vld [vmem:[%s462 + $0x8] sm:$0xf]
        %v466 = vld [vmem:[%s462 + $0xc] sm:$0xf]
        %v467 = vld [vmem:[%s462 + $0x18] sm:$0xf]
        %v468 = vld [vmem:[%s462 + $0x1c] sm:$0xf]
        %v469 = vld [vmem:[%s462 + $0x20] sm:$0xf]
        %v470 = vld [vmem:[%s462 + $0x24] sm:$0xf]
        %v471 = vlaneseq
        %v472 = vshrl.u32 %v471, 7
        %v473 = vsub.s32 0, %v472
        %v474 = vrot.slane %v461, %v473
        %v475 = vmul.f32 %v463, %v474
        %v476 = vmul.f32 %v464, %v474
        %v477 = vmul.f32 %v465, %v474
        %v478 = vmul.f32 %v466, %v474
        %v479 = vmul.f32 %v467, %v474
        %v480 = vmul.f32 %v468, %v474
        %v481 = vmul.f32 %v469, %v474
        %v482 = vmul.f32 %v470, %v474
        %v483 = vadd.f32 %v453, %v475
        %v484 = vadd.f32 %v454, %v476
        %v485 = vadd.f32 %v455, %v477
        %v486 = vadd.f32 %v456, %v478
        %v487 = vadd.f32 %v457, %v479
        %v488 = vadd.f32 %v458, %v480
        %v489 = vadd.f32 %v459, %v481
        %v490 = vadd.f32 %v460, %v482
        %v491 = vld [vmem:[#allocation6 + $0x6] sm:$0x1]
        %s492 = scalar_lea.vmem [#allocation2], 8
        %v493 = vld [vmem:[%s492] sm:$0xf]
        %v494 = vld [vmem:[%s492 + $0x4] sm:$0xf]
        %v495 = vld [vmem:[%s492 + $0x8] sm:$0xf]
        %v496 = vld [vmem:[%s492 + $0xc] sm:$0xf]
        %v497 = vld [vmem:[%s492 + $0x18] sm:$0xf]
        %v498 = vld [vmem:[%s492 + $0x1c] sm:$0xf]
        %v499 = vld [vmem:[%s492 + $0x20] sm:$0xf]
        %v500 = vld [vmem:[%s492 + $0x24] sm:$0xf]
        %v501 = vlaneseq
        %v502 = vshrl.u32 %v501, 7
        %v503 = vsub.s32 0, %v502
        %v504 = vrot.slane %v491, %v503
        %v505 = vmul.f32 %v493, %v504
        %v506 = vmul.f32 %v494, %v504
        %v507 = vmul.f32 %v495, %v504
        %v508 = vmul.f32 %v496, %v504
        %v509 = vmul.f32 %v497, %v504
        %v510 = vmul.f32 %v498, %v504
        %v511 = vmul.f32 %v499, %v504
        %v512 = vmul.f32 %v500, %v504
        %v513 = vadd.f32 %v483, %v505
        %v514 = vadd.f32 %v484, %v506
        %v515 = vadd.f32 %v485, %v507
        %v516 = vadd.f32 %v486, %v508
        %v517 = vadd.f32 %v487, %v509
        %v518 = vadd.f32 %v488, %v510
        %v519 = vadd.f32 %v489, %v511
        %v520 = vadd.f32 %v490, %v512
        %v521 = vld [vmem:[#allocation6 + $0x7] sm:$0x1]
        %s522 = scalar_lea.vmem [#allocation2], 104
        %v523 = vld [vmem:[%s522] sm:$0xf]
        %v524 = vld [vmem:[%s522 + $0x4] sm:$0xf]
        %v525 = vld [vmem:[%s522 + $0x8] sm:$0xf]
        %v526 = vld [vmem:[%s522 + $0xc] sm:$0xf]
        %v527 = vld [vmem:[%s522 + $0x18] sm:$0xf]
        %v528 = vld [vmem:[%s522 + $0x1c] sm:$0xf]
        %v529 = vld [vmem:[%s522 + $0x20] sm:$0xf]
        %v530 = vld [vmem:[%s522 + $0x24] sm:$0xf]
        %v531 = vlaneseq
        %v532 = vshrl.u32 %v531, 7
        %v533 = vsub.s32 0, %v532
        %v534 = vrot.slane %v521, %v533
        %v535 = vmul.f32 %v523, %v534
        %v536 = vmul.f32 %v524, %v534
        %v537 = vmul.f32 %v525, %v534
        %v538 = vmul.f32 %v526, %v534
        %v539 = vmul.f32 %v527, %v534
        %v540 = vmul.f32 %v528, %v534
        %v541 = vmul.f32 %v529, %v534
        %v542 = vmul.f32 %v530, %v534
        %v543 = vadd.f32 %v513, %v535
        %v544 = vadd.f32 %v514, %v536
        %v545 = vadd.f32 %v515, %v537
        %v546 = vadd.f32 %v516, %v538
        %v547 = vadd.f32 %v517, %v539
        %v548 = vadd.f32 %v518, %v540
        %v549 = vadd.f32 %v519, %v541
        %v550 = vadd.f32 %v520, %v542
        %v551 = vld [vmem:[#allocation6 + $0x8] sm:$0x1]
        %s552 = scalar_lea.vmem [#allocation2], 200
        %v553 = vld [vmem:[%s552] sm:$0xf]
        %v554 = vld [vmem:[%s552 + $0x4] sm:$0xf]
        %v555 = vld [vmem:[%s552 + $0x8] sm:$0xf]
        %v556 = vld [vmem:[%s552 + $0xc] sm:$0xf]
        %v557 = vld [vmem:[%s552 + $0x18] sm:$0xf]
        %v558 = vld [vmem:[%s552 + $0x1c] sm:$0xf]
        %v559 = vld [vmem:[%s552 + $0x20] sm:$0xf]
        %v560 = vld [vmem:[%s552 + $0x24] sm:$0xf]
        %v561 = vlaneseq
        %v562 = vshrl.u32 %v561, 7
        %v563 = vsub.s32 0, %v562
        %v564 = vrot.slane %v551, %v563
        %v565 = vmul.f32 %v553, %v564
        %v566 = vmul.f32 %v554, %v564
        %v567 = vmul.f32 %v555, %v564
        %v568 = vmul.f32 %v556, %v564
        %v569 = vmul.f32 %v557, %v564
        %v570 = vmul.f32 %v558, %v564
        %v571 = vmul.f32 %v559, %v564
        %v572 = vmul.f32 %v560, %v564
        %v573 = vadd.f32 %v543, %v565
        %v574 = vadd.f32 %v544, %v566
        %v575 = vadd.f32 %v545, %v567
        %v576 = vadd.f32 %v546, %v568
        %v577 = vadd.f32 %v547, %v569
        %v578 = vadd.f32 %v548, %v570
        %v579 = vadd.f32 %v549, %v571
        %v580 = vadd.f32 %v550, %v572
        %v581 = vld [vmem:[#allocation6 + $0x9] sm:$0x1]
        %v582 = vld [vmem:[%s225] sm:$0xf]
        %v583 = vld [vmem:[%s225 + $0x4] sm:$0xf]
        %v584 = vld [vmem:[%s225 + $0x8] sm:$0xf]
        %v585 = vld [vmem:[%s225 + $0xc] sm:$0xf]
        %v586 = vld [vmem:[%s225 + $0x18] sm:$0xf]
        %v587 = vld [vmem:[%s225 + $0x1c] sm:$0xf]
        %v588 = vld [vmem:[%s225 + $0x20] sm:$0xf]
        %v589 = vld [vmem:[%s225 + $0x24] sm:$0xf]
        %v590 = vlaneseq
        %v591 = vshrl.u32 %v590, 7
        %v592 = vsub.s32 0, %v591
        %v593 = vrot.slane %v581, %v592
        %v594 = vmul.f32 %v582, %v593
        %v595 = vmul.f32 %v583, %v593
        %v596 = vmul.f32 %v584, %v593
        %v597 = vmul.f32 %v585, %v593
        %v598 = vmul.f32 %v586, %v593
        %v599 = vmul.f32 %v587, %v593
        %v600 = vmul.f32 %v588, %v593
        %v601 = vmul.f32 %v589, %v593
        %v602 = vadd.f32 %v573, %v594
        %v603 = vadd.f32 %v574, %v595
        %v604 = vadd.f32 %v575, %v596
        %v605 = vadd.f32 %v576, %v597
        %v606 = vadd.f32 %v577, %v598
        %v607 = vadd.f32 %v578, %v599
        %v608 = vadd.f32 %v579, %v600
        %v609 = vadd.f32 %v580, %v601
        %v610 = vld [vmem:[#allocation6 + $0xa] sm:$0x1]
        %v611 = vld [vmem:[%s245] sm:$0xf]
        %v612 = vld [vmem:[%s245 + $0x4] sm:$0xf]
        %v613 = vld [vmem:[%s245 + $0x8] sm:$0xf]
        %v614 = vld [vmem:[%s245 + $0xc] sm:$0xf]
        %v615 = vld [vmem:[%s245 + $0x18] sm:$0xf]
        %v616 = vld [vmem:[%s245 + $0x1c] sm:$0xf]
        %v617 = vld [vmem:[%s245 + $0x20] sm:$0xf]
        %v618 = vld [vmem:[%s245 + $0x24] sm:$0xf]
        %v619 = vlaneseq
        %v620 = vshrl.u32 %v619, 7
        %v621 = vsub.s32 0, %v620
        %v622 = vrot.slane %v610, %v621
        %v623 = vmul.f32 %v611, %v622
        %v624 = vmul.f32 %v612, %v622
        %v625 = vmul.f32 %v613, %v622
        %v626 = vmul.f32 %v614, %v622
        %v627 = vmul.f32 %v615, %v622
        %v628 = vmul.f32 %v616, %v622
        %v629 = vmul.f32 %v617, %v622
        %v630 = vmul.f32 %v618, %v622
        %v631 = vadd.f32 %v602, %v623
        %v632 = vadd.f32 %v603, %v624
        %v633 = vadd.f32 %v604, %v625
        %v634 = vadd.f32 %v605, %v626
        %v635 = vadd.f32 %v606, %v627
        %v636 = vadd.f32 %v607, %v628
        %v637 = vadd.f32 %v608, %v629
        %v638 = vadd.f32 %v609, %v630
        %v639 = vld [vmem:[#allocation6 + $0xb] sm:$0x1]
        %v640 = vld [vmem:[%s265] sm:$0xf]
        %v641 = vld [vmem:[%s265 + $0x4] sm:$0xf]
        %v642 = vld [vmem:[%s265 + $0x8] sm:$0xf]
        %v643 = vld [vmem:[%s265 + $0xc] sm:$0xf]
        %v644 = vld [vmem:[%s265 + $0x18] sm:$0xf]
        %v645 = vld [vmem:[%s265 + $0x1c] sm:$0xf]
        %v646 = vld [vmem:[%s265 + $0x20] sm:$0xf]
        %v647 = vld [vmem:[%s265 + $0x24] sm:$0xf]
        %v648 = vlaneseq
        %v649 = vshrl.u32 %v648, 7
        %v650 = vsub.s32 0, %v649
        %v651 = vrot.slane %v639, %v650
        %v652 = vmul.f32 %v640, %v651
        %v653 = vmul.f32 %v641, %v651
        %v654 = vmul.f32 %v642, %v651
        %v655 = vmul.f32 %v643, %v651
        %v656 = vmul.f32 %v644, %v651
        %v657 = vmul.f32 %v645, %v651
        %v658 = vmul.f32 %v646, %v651
        %v659 = vmul.f32 %v647, %v651
        %v660 = vadd.f32 %v631, %v652
        %v661 = vadd.f32 %v632, %v653
        %v662 = vadd.f32 %v633, %v654
        %v663 = vadd.f32 %v634, %v655
        %v664 = vadd.f32 %v635, %v656
        %v665 = vadd.f32 %v636, %v657
        %v666 = vadd.f32 %v637, %v658
        %v667 = vadd.f32 %v638, %v659
        %v668 = vld [vmem:[#allocation6 + $0xc] sm:$0x1]
        %v669 = vld [vmem:[%s280] sm:$0xf]
        %v670 = vld [vmem:[%s280 + $0x4] sm:$0xf]
        %v671 = vld [vmem:[%s280 + $0x8] sm:$0xf]
        %v672 = vld [vmem:[%s280 + $0xc] sm:$0xf]
        %v673 = vld [vmem:[%s280 + $0x18] sm:$0xf]
        %v674 = vld [vmem:[%s280 + $0x1c] sm:$0xf]
        %v675 = vld [vmem:[%s280 + $0x20] sm:$0xf]
        %v676 = vld [vmem:[%s280 + $0x24] sm:$0xf]
        %v677 = vlaneseq
        %v678 = vshrl.u32 %v677, 7
        %v679 = vsub.s32 0, %v678
        %v680 = vrot.slane %v668, %v679
        %v681 = vmul.f32 %v669, %v680
        %v682 = vmul.f32 %v670, %v680
        %v683 = vmul.f32 %v671, %v680
        %v684 = vmul.f32 %v672, %v680
        %v685 = vmul.f32 %v673, %v680
        %v686 = vmul.f32 %v674, %v680
        %v687 = vmul.f32 %v675, %v680
        %v688 = vmul.f32 %v676, %v680
        %v689 = vadd.f32 %v660, %v681
        %v690 = vadd.f32 %v661, %v682
        %v691 = vadd.f32 %v662, %v683
        %v692 = vadd.f32 %v663, %v684
        %v693 = vadd.f32 %v664, %v685
        %v694 = vadd.f32 %v665, %v686
        %v695 = vadd.f32 %v666, %v687
        %v696 = vadd.f32 %v667, %v688
        %v697 = vld [vmem:[#allocation6 + $0xd] sm:$0x1]
        %v698 = vld [vmem:[%s271] sm:$0xf]
        %v699 = vld [vmem:[%s271 + $0x4] sm:$0xf]
        %v700 = vld [vmem:[%s271 + $0x8] sm:$0xf]
        %v701 = vld [vmem:[%s271 + $0xc] sm:$0xf]
        %v702 = vld [vmem:[%s271 + $0x18] sm:$0xf]
        %v703 = vld [vmem:[%s271 + $0x1c] sm:$0xf]
        %v704 = vld [vmem:[%s271 + $0x20] sm:$0xf]
        %v705 = vld [vmem:[%s271 + $0x24] sm:$0xf]
        %v706 = vlaneseq
        %v707 = vshrl.u32 %v706, 7
        %v708 = vsub.s32 0, %v707
        %v709 = vrot.slane %v697, %v708
        %v710 = vmul.f32 %v698, %v709
        %v711 = vmul.f32 %v699, %v709
        %v712 = vmul.f32 %v700, %v709
        %v713 = vmul.f32 %v701, %v709
        %v714 = vmul.f32 %v702, %v709
        %v715 = vmul.f32 %v703, %v709
        %v716 = vmul.f32 %v704, %v709
        %v717 = vmul.f32 %v705, %v709
        %v718 = vadd.f32 %v689, %v710
        %v719 = vadd.f32 %v690, %v711
        %v720 = vadd.f32 %v691, %v712
        %v721 = vadd.f32 %v692, %v713
        %v722 = vadd.f32 %v693, %v714
        %v723 = vadd.f32 %v694, %v715
        %v724 = vadd.f32 %v695, %v716
        %v725 = vadd.f32 %v696, %v717
        %v726 = vld [vmem:[#allocation6 + $0xe] sm:$0x1]
        %v727 = vld [vmem:[%s297] sm:$0xf]
        %v728 = vld [vmem:[%s297 + $0x4] sm:$0xf]
        %v729 = vld [vmem:[%s297 + $0x8] sm:$0xf]
        %v730 = vld [vmem:[%s297 + $0xc] sm:$0xf]
        %v731 = vld [vmem:[%s297 + $0x18] sm:$0xf]
        %v732 = vld [vmem:[%s297 + $0x1c] sm:$0xf]
        %v733 = vld [vmem:[%s297 + $0x20] sm:$0xf]
        %v734 = vld [vmem:[%s297 + $0x24] sm:$0xf]
        %v735 = vlaneseq
        %v736 = vshrl.u32 %v735, 7
        %v737 = vsub.s32 0, %v736
        %v738 = vrot.slane %v726, %v737
        %v739 = vmul.f32 %v727, %v738
        %v740 = vmul.f32 %v728, %v738
        %v741 = vmul.f32 %v729, %v738
        %v742 = vmul.f32 %v730, %v738
        %v743 = vmul.f32 %v731, %v738
        %v744 = vmul.f32 %v732, %v738
        %v745 = vmul.f32 %v733, %v738
        %v746 = vmul.f32 %v734, %v738
        %v747 = vadd.f32 %v718, %v739
        %v748 = vadd.f32 %v719, %v740
        %v749 = vadd.f32 %v720, %v741
        %v750 = vadd.f32 %v721, %v742
        %v751 = vadd.f32 %v722, %v743
        %v752 = vadd.f32 %v723, %v744
        %v753 = vadd.f32 %v724, %v745
        %v754 = vadd.f32 %v725, %v746
        %v755 = vld [vmem:[#allocation6 + $0xf] sm:$0x1]
        %s756 = scalar_lea.vmem [#allocation2], 32
        %v757 = vld [vmem:[%s756] sm:$0xf]
        %v758 = vld [vmem:[%s756 + $0x4] sm:$0xf]
        %v759 = vld [vmem:[%s756 + $0x8] sm:$0xf]
        %v760 = vld [vmem:[%s756 + $0xc] sm:$0xf]
        %v761 = vld [vmem:[%s756 + $0x18] sm:$0xf]
        %v762 = vld [vmem:[%s756 + $0x1c] sm:$0xf]
        %v763 = vld [vmem:[%s756 + $0x20] sm:$0xf]
        %v764 = vld [vmem:[%s756 + $0x24] sm:$0xf]
        %v765 = vlaneseq
        %v766 = vshrl.u32 %v765, 7
        %v767 = vsub.s32 0, %v766
        %v768 = vrot.slane %v755, %v767
        %v769 = vmul.f32 %v757, %v768
        %v770 = vmul.f32 %v758, %v768
        %v771 = vmul.f32 %v759, %v768
        %v772 = vmul.f32 %v760, %v768
        %v773 = vmul.f32 %v761, %v768
        %v774 = vmul.f32 %v762, %v768
        %v775 = vmul.f32 %v763, %v768
        %v776 = vmul.f32 %v764, %v768
        %v777 = vadd.f32 %v747, %v769
        %v778 = vadd.f32 %v748, %v770
        %v779 = vadd.f32 %v749, %v771
        %v780 = vadd.f32 %v750, %v772
        %v781 = vadd.f32 %v751, %v773
        %v782 = vadd.f32 %v752, %v774
        %v783 = vadd.f32 %v753, %v775
        %v784 = vadd.f32 %v754, %v776
        %v785 = vld [vmem:[#allocation6 + $0x10] sm:$0x1]
        %s786 = scalar_lea.vmem [#allocation2], 128
        %v787 = vld [vmem:[%s786] sm:$0xf]
        %v788 = vld [vmem:[%s786 + $0x4] sm:$0xf]
        %v789 = vld [vmem:[%s786 + $0x8] sm:$0xf]
        %v790 = vld [vmem:[%s786 + $0xc] sm:$0xf]
        %v791 = vld [vmem:[%s786 + $0x18] sm:$0xf]
        %v792 = vld [vmem:[%s786 + $0x1c] sm:$0xf]
        %v793 = vld [vmem:[%s786 + $0x20] sm:$0xf]
        %v794 = vld [vmem:[%s786 + $0x24] sm:$0xf]
        %v795 = vlaneseq
        %v796 = vshrl.u32 %v795, 7
        %v797 = vsub.s32 0, %v796
        %v798 = vrot.slane %v785, %v797
        %v799 = vmul.f32 %v787, %v798
        %v800 = vmul.f32 %v788, %v798
        %v801 = vmul.f32 %v789, %v798
        %v802 = vmul.f32 %v790, %v798
        %v803 = vmul.f32 %v791, %v798
        %v804 = vmul.f32 %v792, %v798
        %v805 = vmul.f32 %v793, %v798
        %v806 = vmul.f32 %v794, %v798
        %v807 = vadd.f32 %v777, %v799
        %v808 = vadd.f32 %v778, %v800
        %v809 = vadd.f32 %v779, %v801
        %v810 = vadd.f32 %v780, %v802
        %v811 = vadd.f32 %v781, %v803
        %v812 = vadd.f32 %v782, %v804
        %v813 = vadd.f32 %v783, %v805
        %v814 = vadd.f32 %v784, %v806
        %v815 = vld [vmem:[#allocation6 + $0x11] sm:$0x1]
        %s816 = scalar_lea.vmem [#allocation2], 224
        %v817 = vld [vmem:[%s816] sm:$0xf]
        %v818 = vld [vmem:[%s816 + $0x4] sm:$0xf]
        %v819 = vld [vmem:[%s816 + $0x8] sm:$0xf]
        %v820 = vld [vmem:[%s816 + $0xc] sm:$0xf]
        %v821 = vld [vmem:[%s816 + $0x18] sm:$0xf]
        %v822 = vld [vmem:[%s816 + $0x1c] sm:$0xf]
        %v823 = vld [vmem:[%s816 + $0x20] sm:$0xf]
        %v824 = vld [vmem:[%s816 + $0x24] sm:$0xf]
        %v825 = vlaneseq
        %v826 = vshrl.u32 %v825, 7
        %v827 = vsub.s32 0, %v826
        %v828 = vrot.slane %v815, %v827
        %v829 = vmul.f32 %v817, %v828
        %v830 = vmul.f32 %v818, %v828
        %v831 = vmul.f32 %v819, %v828
        %v832 = vmul.f32 %v820, %v828
        %v833 = vmul.f32 %v821, %v828
        %v834 = vmul.f32 %v822, %v828
        %v835 = vmul.f32 %v823, %v828
        %v836 = vmul.f32 %v824, %v828
        %v837 = vadd.f32 %v807, %v829
        %v838 = vadd.f32 %v808, %v830
        %v839 = vadd.f32 %v809, %v831
        %v840 = vadd.f32 %v810, %v832
        %v841 = vadd.f32 %v811, %v833
        %v842 = vadd.f32 %v812, %v834
        %v843 = vadd.f32 %v813, %v835
        %v844 = vadd.f32 %v814, %v836
        %v845 = vld [vmem:[#allocation6 + $0x12] sm:$0x1]
        %s846 = scalar_lea.vmem [#allocation2], 48
        %v847 = vld [vmem:[%s846] sm:$0xf]
        %v848 = vld [vmem:[%s846 + $0x4] sm:$0xf]
        %v849 = vld [vmem:[%s846 + $0x8] sm:$0xf]
        %v850 = vld [vmem:[%s846 + $0xc] sm:$0xf]
        %v851 = vld [vmem:[%s846 + $0x18] sm:$0xf]
        %v852 = vld [vmem:[%s846 + $0x1c] sm:$0xf]
        %v853 = vld [vmem:[%s846 + $0x20] sm:$0xf]
        %v854 = vld [vmem:[%s846 + $0x24] sm:$0xf]
        %v855 = vlaneseq
        %v856 = vshrl.u32 %v855, 7
        %v857 = vsub.s32 0, %v856
        %v858 = vrot.slane %v845, %v857
        %v859 = vmul.f32 %v847, %v858
        %v860 = vmul.f32 %v848, %v858
        %v861 = vmul.f32 %v849, %v858
        %v862 = vmul.f32 %v850, %v858
        %v863 = vmul.f32 %v851, %v858
        %v864 = vmul.f32 %v852, %v858
        %v865 = vmul.f32 %v853, %v858
        %v866 = vmul.f32 %v854, %v858
        %v867 = vadd.f32 %v837, %v859
        %v868 = vadd.f32 %v838, %v860
        %v869 = vadd.f32 %v839, %v861
        %v870 = vadd.f32 %v840, %v862
        %v871 = vadd.f32 %v841, %v863
        %v872 = vadd.f32 %v842, %v864
        %v873 = vadd.f32 %v843, %v865
        %v874 = vadd.f32 %v844, %v866
        %v875 = vld [vmem:[#allocation6 + $0x13] sm:$0x1]
        %s876 = scalar_lea.vmem [#allocation2], 144
        %v877 = vld [vmem:[%s876] sm:$0xf]
        %v878 = vld [vmem:[%s876 + $0x4] sm:$0xf]
        %v879 = vld [vmem:[%s876 + $0x8] sm:$0xf]
        %v880 = vld [vmem:[%s876 + $0xc] sm:$0xf]
        %v881 = vld [vmem:[%s876 + $0x18] sm:$0xf]
        %v882 = vld [vmem:[%s876 + $0x1c] sm:$0xf]
        %v883 = vld [vmem:[%s876 + $0x20] sm:$0xf]
        %v884 = vld [vmem:[%s876 + $0x24] sm:$0xf]
        %v885 = vlaneseq
        %v886 = vshrl.u32 %v885, 7
        %v887 = vsub.s32 0, %v886
        %v888 = vrot.slane %v875, %v887
        %v889 = vmul.f32 %v877, %v888
        %v890 = vmul.f32 %v878, %v888
        %v891 = vmul.f32 %v879, %v888
        %v892 = vmul.f32 %v880, %v888
        %v893 = vmul.f32 %v881, %v888
        %v894 = vmul.f32 %v882, %v888
        %v895 = vmul.f32 %v883, %v888
        %v896 = vmul.f32 %v884, %v888
        %v897 = vadd.f32 %v867, %v889
        %v898 = vadd.f32 %v868, %v890
        %v899 = vadd.f32 %v869, %v891
        %v900 = vadd.f32 %v870, %v892
        %v901 = vadd.f32 %v871, %v893
        %v902 = vadd.f32 %v872, %v894
        %v903 = vadd.f32 %v873, %v895
        %v904 = vadd.f32 %v874, %v896
        %v905 = vld [vmem:[#allocation6 + $0x14] sm:$0x1]
        %s906 = scalar_lea.vmem [#allocation2], 240
        %v907 = vld [vmem:[%s906] sm:$0xf]
        %v908 = vld [vmem:[%s906 + $0x4] sm:$0xf]
        %v909 = vld [vmem:[%s906 + $0x8] sm:$0xf]
        %v910 = vld [vmem:[%s906 + $0xc] sm:$0xf]
        %v911 = vld [vmem:[%s906 + $0x18] sm:$0xf]
        %v912 = vld [vmem:[%s906 + $0x1c] sm:$0xf]
        %v913 = vld [vmem:[%s906 + $0x20] sm:$0xf]
        %v914 = vld [vmem:[%s906 + $0x24] sm:$0xf]
        %v915 = vlaneseq
        %v916 = vshrl.u32 %v915, 7
        %v917 = vsub.s32 0, %v916
        %v918 = vrot.slane %v905, %v917
        %v919 = vmul.f32 %v907, %v918
        %v920 = vmul.f32 %v908, %v918
        %v921 = vmul.f32 %v909, %v918
        %v922 = vmul.f32 %v910, %v918
        %v923 = vmul.f32 %v911, %v918
        %v924 = vmul.f32 %v912, %v918
        %v925 = vmul.f32 %v913, %v918
        %v926 = vmul.f32 %v914, %v918
        %v927 = vadd.f32 %v897, %v919
        %v928 = vadd.f32 %v898, %v920
        %v929 = vadd.f32 %v899, %v921
        %v930 = vadd.f32 %v900, %v922
        %v931 = vadd.f32 %v901, %v923
        %v932 = vadd.f32 %v902, %v924
        %v933 = vadd.f32 %v903, %v925
        %v934 = vadd.f32 %v904, %v926
        %v935 = vld [vmem:[#allocation6 + $0x15] sm:$0x1]
        %s936 = scalar_lea.vmem [#allocation2], 52
        %v937 = vld [vmem:[%s936] sm:$0xf]
        %v938 = vld [vmem:[%s936 + $0x4] sm:$0xf]
        %v939 = vld [vmem:[%s936 + $0x8] sm:$0xf]
        %v940 = vld [vmem:[%s936 + $0xc] sm:$0xf]
        %v941 = vld [vmem:[%s936 + $0x18] sm:$0xf]
        %v942 = vld [vmem:[%s936 + $0x1c] sm:$0xf]
        %v943 = vld [vmem:[%s936 + $0x20] sm:$0xf]
        %v944 = vld [vmem:[%s936 + $0x24] sm:$0xf]
        %v945 = vlaneseq
        %v946 = vshrl.u32 %v945, 7
        %v947 = vsub.s32 0, %v946
        %v948 = vrot.slane %v935, %v947
        %v949 = vmul.f32 %v937, %v948
        %v950 = vmul.f32 %v938, %v948
        %v951 = vmul.f32 %v939, %v948
        %v952 = vmul.f32 %v940, %v948
        %v953 = vmul.f32 %v941, %v948
        %v954 = vmul.f32 %v942, %v948
        %v955 = vmul.f32 %v943, %v948
        %v956 = vmul.f32 %v944, %v948
        %v957 = vadd.f32 %v927, %v949
        %v958 = vadd.f32 %v928, %v950
        %v959 = vadd.f32 %v929, %v951
        %v960 = vadd.f32 %v930, %v952
        %v961 = vadd.f32 %v931, %v953
        %v962 = vadd.f32 %v932, %v954
        %v963 = vadd.f32 %v933, %v955
        %v964 = vadd.f32 %v934, %v956
        %v965 = vld [vmem:[#allocation6 + $0x16] sm:$0x1]
        %s966 = scalar_lea.vmem [#allocation2], 148
        %v967 = vld [vmem:[%s966] sm:$0xf]
        %v968 = vld [vmem:[%s966 + $0x4] sm:$0xf]
        %v969 = vld [vmem:[%s966 + $0x8] sm:$0xf]
        %v970 = vld [vmem:[%s966 + $0xc] sm:$0xf]
        %v971 = vld [vmem:[%s966 + $0x18] sm:$0xf]
        %v972 = vld [vmem:[%s966 + $0x1c] sm:$0xf]
        %v973 = vld [vmem:[%s966 + $0x20] sm:$0xf]
        %v974 = vld [vmem:[%s966 + $0x24] sm:$0xf]
        %v975 = vlaneseq
        %v976 = vshrl.u32 %v975, 7
        %v977 = vsub.s32 0, %v976
        %v978 = vrot.slane %v965, %v977
        %v979 = vmul.f32 %v967, %v978
        %v980 = vmul.f32 %v968, %v978
        %v981 = vmul.f32 %v969, %v978
        %v982 = vmul.f32 %v970, %v978
        %v983 = vmul.f32 %v971, %v978
        %v984 = vmul.f32 %v972, %v978
        %v985 = vmul.f32 %v973, %v978
        %v986 = vmul.f32 %v974, %v978
        %v987 = vadd.f32 %v957, %v979
        %v988 = vadd.f32 %v958, %v980
        %v989 = vadd.f32 %v959, %v981
        %v990 = vadd.f32 %v960, %v982
        %v991 = vadd.f32 %v961, %v983
        %v992 = vadd.f32 %v962, %v984
        %v993 = vadd.f32 %v963, %v985
        %v994 = vadd.f32 %v964, %v986
        %v995 = vld [vmem:[#allocation6 + $0x17] sm:$0x1]
        %s996 = scalar_lea.vmem [#allocation2], 244
        %v997 = vld [vmem:[%s996] sm:$0xf]
        %v998 = vld [vmem:[%s996 + $0x4] sm:$0xf]
        %v999 = vld [vmem:[%s996 + $0x8] sm:$0xf]
        %v1000 = vld [vmem:[%s996 + $0xc] sm:$0xf]
        %v1001 = vld [vmem:[%s996 + $0x18] sm:$0xf]
        %v1002 = vld [vmem:[%s996 + $0x1c] sm:$0xf]
        %v1003 = vld [vmem:[%s996 + $0x20] sm:$0xf]
        %v1004 = vld [vmem:[%s996 + $0x24] sm:$0xf]
        %v1005 = vlaneseq
        %v1006 = vshrl.u32 %v1005, 7
        %v1007 = vsub.s32 0, %v1006
        %v1008 = vrot.slane %v995, %v1007
        %v1009 = vmul.f32 %v997, %v1008
        %v1010 = vmul.f32 %v998, %v1008
        %v1011 = vmul.f32 %v999, %v1008
        %v1012 = vmul.f32 %v1000, %v1008
        %v1013 = vmul.f32 %v1001, %v1008
        %v1014 = vmul.f32 %v1002, %v1008
        %v1015 = vmul.f32 %v1003, %v1008
        %v1016 = vmul.f32 %v1004, %v1008
        %v1017 = vadd.f32 %v987, %v1009
        %v1018 = vadd.f32 %v988, %v1010
        %v1019 = vadd.f32 %v989, %v1011
        %v1020 = vadd.f32 %v990, %v1012
        %v1021 = vadd.f32 %v991, %v1013
        %v1022 = vadd.f32 %v992, %v1014
        %v1023 = vadd.f32 %v993, %v1015
        %v1024 = vadd.f32 %v994, %v1016
        %v1025 = vld [vmem:[#allocation6 + $0x18] sm:$0x1]
        %s1026 = scalar_lea.vmem [#allocation2], 56
        %v1027 = vld [vmem:[%s1026] sm:$0xf]
        %v1028 = vld [vmem:[%s1026 + $0x4] sm:$0xf]
        %v1029 = vld [vmem:[%s1026 + $0x8] sm:$0xf]
        %v1030 = vld [vmem:[%s1026 + $0xc] sm:$0xf]
        %v1031 = vld [vmem:[%s1026 + $0x18] sm:$0xf]
        %v1032 = vld [vmem:[%s1026 + $0x1c] sm:$0xf]
        %v1033 = vld [vmem:[%s1026 + $0x20] sm:$0xf]
        %v1034 = vld [vmem:[%s1026 + $0x24] sm:$0xf]
        %v1035 = vlaneseq
        %v1036 = vshrl.u32 %v1035, 7
        %v1037 = vsub.s32 0, %v1036
        %v1038 = vrot.slane %v1025, %v1037
        %v1039 = vmul.f32 %v1027, %v1038
        %v1040 = vmul.f32 %v1028, %v1038
        %v1041 = vmul.f32 %v1029, %v1038
        %v1042 = vmul.f32 %v1030, %v1038
        %v1043 = vmul.f32 %v1031, %v1038
        %v1044 = vmul.f32 %v1032, %v1038
        %v1045 = vmul.f32 %v1033, %v1038
        %v1046 = vmul.f32 %v1034, %v1038
        %v1047 = vadd.f32 %v1017, %v1039
        %v1048 = vadd.f32 %v1018, %v1040
        %v1049 = vadd.f32 %v1019, %v1041
        %v1050 = vadd.f32 %v1020, %v1042
        %v1051 = vadd.f32 %v1021, %v1043
        %v1052 = vadd.f32 %v1022, %v1044
        %v1053 = vadd.f32 %v1023, %v1045
        %v1054 = vadd.f32 %v1024, %v1046
        %v1055 = vld [vmem:[#allocation6 + $0x19] sm:$0x1]
        %s1056 = scalar_lea.vmem [#allocation2], 152
        %v1057 = vld [vmem:[%s1056] sm:$0xf]
        %v1058 = vld [vmem:[%s1056 + $0x4] sm:$0xf]
        %v1059 = vld [vmem:[%s1056 + $0x8] sm:$0xf]
        %v1060 = vld [vmem:[%s1056 + $0xc] sm:$0xf]
        %v1061 = vld [vmem:[%s1056 + $0x18] sm:$0xf]
        %v1062 = vld [vmem:[%s1056 + $0x1c] sm:$0xf]
        %v1063 = vld [vmem:[%s1056 + $0x20] sm:$0xf]
        %v1064 = vld [vmem:[%s1056 + $0x24] sm:$0xf]
        %v1065 = vlaneseq
        %v1066 = vshrl.u32 %v1065, 7
        %v1067 = vsub.s32 0, %v1066
        %v1068 = vrot.slane %v1055, %v1067
        %v1069 = vmul.f32 %v1057, %v1068
        %v1070 = vmul.f32 %v1058, %v1068
        %v1071 = vmul.f32 %v1059, %v1068
        %v1072 = vmul.f32 %v1060, %v1068
        %v1073 = vmul.f32 %v1061, %v1068
        %v1074 = vmul.f32 %v1062, %v1068
        %v1075 = vmul.f32 %v1063, %v1068
        %v1076 = vmul.f32 %v1064, %v1068
        %v1077 = vadd.f32 %v1047, %v1069
        %v1078 = vadd.f32 %v1048, %v1070
        %v1079 = vadd.f32 %v1049, %v1071
        %v1080 = vadd.f32 %v1050, %v1072
        %v1081 = vadd.f32 %v1051, %v1073
        %v1082 = vadd.f32 %v1052, %v1074
        %v1083 = vadd.f32 %v1053, %v1075
        %v1084 = vadd.f32 %v1054, %v1076
        %v1085 = vld [vmem:[#allocation6 + $0x1a] sm:$0x1]
        %s1086 = scalar_lea.vmem [#allocation2], 248
        %v1087 = vld [vmem:[%s1086] sm:$0xf]
        %v1088 = vld [vmem:[%s1086 + $0x4] sm:$0xf]
        %v1089 = vld [vmem:[%s1086 + $0x8] sm:$0xf]
        %v1090 = vld [vmem:[%s1086 + $0xc] sm:$0xf]
        %v1091 = vld [vmem:[%s1086 + $0x18] sm:$0xf]
        %v1092 = vld [vmem:[%s1086 + $0x1c] sm:$0xf]
        %v1093 = vld [vmem:[%s1086 + $0x20] sm:$0xf]
        %v1094 = vld [vmem:[%s1086 + $0x24] sm:$0xf]
        %v1095 = vlaneseq
        %v1096 = vshrl.u32 %v1095, 7
        %v1097 = vsub.s32 0, %v1096
        %v1098 = vrot.slane %v1085, %v1097
        %v1099 = vmul.f32 %v1087, %v1098
        %v1100 = vmul.f32 %v1088, %v1098
        %v1101 = vmul.f32 %v1089, %v1098
        %v1102 = vmul.f32 %v1090, %v1098
        %v1103 = vmul.f32 %v1091, %v1098
        %v1104 = vmul.f32 %v1092, %v1098
        %v1105 = vmul.f32 %v1093, %v1098
        %v1106 = vmul.f32 %v1094, %v1098
        %v1107 = vadd.f32 %v1077, %v1099
        %v1108 = vadd.f32 %v1078, %v1100
        %v1109 = vadd.f32 %v1079, %v1101
        %v1110 = vadd.f32 %v1080, %v1102
        %v1111 = vadd.f32 %v1081, %v1103
        %v1112 = vadd.f32 %v1082, %v1104
        %v1113 = vadd.f32 %v1083, %v1105
        %v1114 = vadd.f32 %v1084, %v1106
        %v1115 = vld [vmem:[%s2] sm:$0x1]
        %v1117 = vlaneseq
        %v1118 = vshrl.u32 %v1117, 7
        %v1119 = vsub.s32 0, %v1118
        %v1120 = vrot.slane %v1115, %v1119
        %v1122 = vadd.f32 %v1107, %v1120
        %v1123 = vadd.f32 %v1108, %v1120
        %v1124 = vadd.f32 %v1109, %v1120
        %v1125 = vadd.f32 %v1110, %v1120
        %v1126 = vadd.f32 %v1111, %v1120
        %v1127 = vadd.f32 %v1112, %v1120
        %v1128 = vadd.f32 %v1113, %v1120
        %v1129 = vadd.f32 %v1114, %v1120
        %1130 = vst [vmem:[%s203] sm:$0xf] %v1122
        %1131 = vst [vmem:[%s203 + $0x4] sm:$0xf] %v1123
        %1132 = vst [vmem:[%s203 + $0x8] sm:$0xf] %v1124
        %1133 = vst [vmem:[%s203 + $0xc] sm:$0xf] %v1125
        %1134 = vst [vmem:[%s203 + $0x10] sm:$0xf] %v1126
        %1135 = vst [vmem:[%s203 + $0x14] sm:$0xf] %v1127
        %1136 = vst [vmem:[%s203 + $0x18] sm:$0xf] %v1128
        %1137 = vst [vmem:[%s203 + $0x1c] sm:$0xf] %v1129
        %s1138 = sand.u32 %s97, 1
        %s1139 = scalar_lea.sflag [#allocation5], %s1138
        %s1140 = sand.u32 %s97, 1
        %s1141 = smul.addr %s1140, 32
        %s1142 = scalar_lea.vmem [#allocation8], %s1141
        // Predicated region
        $region41: #{tpu_custom_call.1} parent=31 // pred_check
          %p1143 = pneg %p107
        $region42: #{tpu_custom_call.1} parent=31 // pred_check_branch
          %1145 = sbr.rel (%p1143) target = $region44
        $region43: #{tpu_custom_call.1} parent=31 // pred_region
          %s1147 = ssub.s32 512, 512
          %1148 = vsyncadd %s1139, %s1147
          %s1149 = smul.addr %s21, 8
          %s1150 = smul.addr %s1149, 64
          %s1151 = scalar_lea.hbm %s3, %s1150
          %s1152 = sshll.u32 %s1142, 4
          %s1153 = int_to_ptr.vmem [resolvable:$true] %s1152
          %1158 = dma.vmem_to_hbm [thread:$0]  %s1153, 512, %s1151, %s1139, 64, 64, 4
        $region44: #{tpu_custom_call.1} parent=31 // pred_fallthru
          _
      $region32: #{tpu_custom_call.1} parent=5 // pred_fallthru
        _
      %p1159 = scmp.le.s32.totalorder 2, %s16
      // Predicated region
      $region45: #{tpu_custom_call.1} parent=5 // pred_check
        %p1160 = pneg %p1159
      $region46: #{tpu_custom_call.1} parent=5 // pred_check_branch
        %1162 = sbr.rel (%p1160) target = $region48
      $region47: #{tpu_custom_call.1} parent=5 // pred_region
        %s1163 = ssub.s32 %s16, 2
        // Predicated region
        $region49: #{tpu_custom_call.1} parent=47 // pred_check
          %p1164 = pneg %p113
        $region50: #{tpu_custom_call.1} parent=47 // pred_check_branch
          %1166 = sbr.rel (%p1164) target = $region52
        $region51: #{tpu_custom_call.1} parent=47 // pred_region
          %s1167 = sand.u32 %s98, 1
          %s1168 = scalar_lea.sflag [#allocation5], %s1167
          %s1169 = sand.u32 %s98, 1
          %s1170 = smul.addr %s1169, 32
          %s1171 = scalar_lea.vmem [#allocation8], %s1170
          %1172 = dma.done %s1168, 512
        $region52: #{tpu_custom_call.1} parent=47 // pred_fallthru
          _
      $region48: #{tpu_custom_call.1} parent=5 // pred_fallthru
        _
    $region6: #{tpu_custom_call.1} parent=1 // loop_footer
      %s20 = sadd.s32 1, %s16
    $region7: #{tpu_custom_call.1} parent=1 // loop_footer_branch
      %15 = sbr.rel target = $region3
    $region8: #{tpu_custom_call.1} parent=1 // loop_exit
      _
    %1173 = vsyncpa [#allocation4], 1
    %s1174 = scalar_lea.sflag [#allocation4], 1
    %1175 = vsyncpa %s1174, 1
    %1176 = vsyncpa [#allocation7], 1
    %1177 = vsyncpa [#allocation5], 1
    %s1178 = scalar_lea.sflag [#allocation5], 1
    %1179 = vsyncpa %s1178, 1

</llo_original>
